<compile_context>
chip_gen: v7x
topology: tpu7x:2x2x1
jax: 0.10.0
libtpu: 0.0.40
codegen_flags: <defaults>
</compile_context>

<pallas_src>
import functools
import math

import jax
import jax.numpy as jnp
import numpy as np
from jax.experimental import pallas as pl
from jax.experimental.pallas import tpu as pltpu


# -----------------------------------------------------------------------------
# Pallas kernel
# -----------------------------------------------------------------------------
def _icnn_forward_kernel(x_ref, tcol_ref, z0_ref, wall_ref, ball_ref, *refs,
                         layer_sizes, d, eps):
    """Per-tile compute.

    x_ref    : (dim, TN)          batch tile, batch on the lane axis
    tcol_ref : (dim, 1)           target column (for eps * ||x - t||^2)
    z0_ref   : (L_last_pad, 1)    icnn(target), precomputed in the wrapper
    wall_ref : (sum(Li_pad), dim) stacked (row-padded) W0..W_{L-1}
    ball_ref : (sum(Li_pad), 1)   stacked (row-padded) b0..b_{L-1}
    refs     = [softplus(U1), softplus(U2), ..., out_ref]  (zero-padded U's)
    out_ref  : (L_last_pad, TN)
    """
    *u_refs, o_ref = refs

    def smooth_relu(v):
        r = jnp.maximum(v, 0.0)
        return jnp.where(r < d, r * r / (2.0 * d), v - d / 2.0)

    x = x_ref[...]                                               # (dim, TN)

    # One fused MXU pass for every layer's  W_i @ x + b_i.
    wx = jnp.dot(wall_ref[...], x, preferred_element_type=jnp.float32) \
        + ball_ref[...]                                          # (sum, TN)

    # Layer 0: z = smooth_relu(W0 @ x + b0)
    z = smooth_relu(wx[: layer_sizes[0]])
    off = layer_sizes[0]
    # Layers 1..: z = smooth_relu(Wi @ x + bi + softplus(Ui) @ z)
    for i, u_ref in enumerate(u_refs):
        li = layer_sizes[i + 1]
        pre = wx[off: off + li]                                  # static, 8-aligned
        off += li
        z = smooth_relu(
            pre + jnp.dot(u_ref[...], z, preferred_element_type=jnp.float32)
        )

    # regular = eps * ||x - target||^2 per batch element   -> (1, TN)
    diff = x - tcol_ref[...]
    regular = eps * jnp.sum(diff * diff, axis=0, keepdims=True)

    # (smooth_relu(z - z0).T + regular(N,1)) == (smooth_relu(z-z0) + regular(1,N)).T
    o_ref[...] = smooth_relu(z - z0_ref[...]) + regular


# -----------------------------------------------------------------------------
# Grid-invariant helpers (plain JAX, executed once in the jitted wrapper)
# -----------------------------------------------------------------------------
def _smooth_relu_jax(v, d):
    r = jnp.maximum(v, 0.0)
    return jnp.where(r < d, r * r / (2.0 * d), v - d / 2.0)


def _icnn_jax(x_cols, ws, bs, sp_us, *, d):
    """icnn on columns x_cols of shape (dim, M)."""
    z = _smooth_relu_jax(ws[0] @ x_cols + bs[0], d)
    for i in range(len(sp_us)):
        z = _smooth_relu_jax(ws[i + 1] @ x_cols + bs[i + 1] + sp_us[i] @ z, d)
    return z


def _round_up(n, m):
    return ((n + m - 1) // m) * m


def _auto_batch_tiling(n, requested_tile):
    """Pick (tile_cols, num_tiles): lane-dense, few & large tiles.

    - pad batch to a multiple of 128 (unmasked vst on the store path),
    - small N -> single grid step (no per-step overhead on single-TC chips),
    - larger N -> split into 2+ "parallel" steps so both v7x TCs get work,
    - cap per-tile columns so the f32 VMEM working set stays well inside the
      scoped-VMEM default of every TPU generation (incl. v5e's 16 MiB).
    """
    lane = 128
    n_pad = _round_up(max(n, 1), lane)
    max_cols = 8 * 1024
    if requested_tile is not None:
        tile = min(_round_up(requested_tile, lane), n_pad)
    elif n_pad <= 512:
        tile = n_pad
    else:
        tile = min(_round_up(pl.cdiv(n_pad, 2), lane), max_cols)
    n_tiles = pl.cdiv(n_pad, tile)
    return tile, n_tiles


# -----------------------------------------------------------------------------
# Wrapper (fully jitted: precompute + layout ops + pallas_call in one dispatch)
# -----------------------------------------------------------------------------
@functools.partial(jax.jit, static_argnames=("d", "eps", "batch_tile"))
def icnn_forward(x, target, ws, bs, us, *, d=0.1, eps=0.001, batch_tile=None):
    """x: (N, dim) float32, target: (1, dim). Returns (N, L_last) like PyTorch."""
    N, dim = x.shape
    layer_sizes = tuple(int(w.shape[0]) for w in ws)
    l_last = layer_sizes[-1]

    # --- grid-invariant precompute (parameter-only; cheap & fused under jit;
    #     hoist out of the per-call path if params are reused across calls) ---
    ls_pad = tuple(_round_up(l, 8) for l in layer_sizes)   # sublane alignment
    ws_p = [jnp.pad(w, ((0, lp - l), (0, 0)))
            for w, l, lp in zip(ws, layer_sizes, ls_pad)]
    bs_p = [jnp.pad(b, ((0, lp - l), (0, 0)))
            for b, l, lp in zip(bs, layer_sizes, ls_pad)]
    # softplus FIRST, then zero-pad, so padded rows/cols contribute nothing.
    sp_us = [jnp.pad(jax.nn.softplus(u),
                     ((0, ls_pad[i + 1] - layer_sizes[i + 1]),
                      (0, ls_pad[i] - layer_sizes[i])))
             for i, u in enumerate(us)]
    w_all = jnp.concatenate(ws_p, axis=0)               # (sum(Li_pad), dim)
    b_all = jnp.concatenate(bs_p, axis=0)               # (sum(Li_pad), 1)
    t_col = target.T.astype(jnp.float32)                # (dim, 1)
    z0 = _icnn_jax(t_col, ws_p, bs_p, sp_us, d=d)       # (L_last_pad, 1)
    l_last_pad = ls_pad[-1]

    # --- batch tiling (lane axis) ---
    tile, n_tiles = _auto_batch_tiling(N, batch_tile)
    padded_n = n_tiles * tile
    x_t = x.T                                            # (dim, N)
    if padded_n != N:
        x_t = jnp.pad(x_t, ((0, 0), (0, padded_n - N)))

    grid = (n_tiles,)
    in_specs = [
        pl.BlockSpec((dim, tile), lambda i: (0, i)),     # x^T tile
        pl.BlockSpec(t_col.shape, lambda i: (0, 0)),     # target column
        pl.BlockSpec(z0.shape, lambda i: (0, 0)),        # icnn(target)
        pl.BlockSpec(w_all.shape, lambda i: (0, 0)),     # stacked W
        pl.BlockSpec(b_all.shape, lambda i: (0, 0)),     # stacked b
    ] + [pl.BlockSpec(u.shape, lambda i: (0, 0)) for u in sp_us]
    out_specs = pl.BlockSpec((l_last_pad, tile), lambda i: (0, i))

    kernel = functools.partial(
        _icnn_forward_kernel, layer_sizes=ls_pad, d=d, eps=eps
    )

    out_t = pl.pallas_call(
        kernel,
        out_shape=jax.ShapeDtypeStruct((l_last_pad, padded_n), jnp.float32),
        grid=grid,
        in_specs=in_specs,
        out_specs=out_specs,
        compiler_params=pltpu.CompilerParams(dimension_semantics=("parallel",)),
    )(x_t, t_col, z0, w_all, b_all, *sp_us)

    return out_t[:l_last, :N].T  # (N, L_last), matches PyTorch forward()


# -----------------------------------------------------------------------------
# Pure-JAX reference (mirrors the PyTorch code)
# -----------------------------------------------------------------------------
def _forward_ref(x, target, ws, bs, us, *, d, eps):
    def sr(v):
        r = jnp.maximum(v, 0.0)
        return jnp.where(r < d, r * r / (2.0 * d), v - d / 2.0)

    def icnn(xm_t):
        z = sr(ws[0] @ xm_t + bs[0])
        for i in range(len(us)):
            z = sr(ws[i + 1] @ xm_t + bs[i + 1] + jax.nn.softplus(us[i]) @ z)
        return z

    N = x.shape[0]
    t_rep = jnp.broadcast_to(target, (N, target.shape[1]))
    z = icnn(x.T)
    z0 = icnn(t_rep.T)
    regular = eps * jnp.sum((x - t_rep) ** 2, axis=1, keepdims=True)
    return sr(z - z0).T + regular


# -----------------------------------------------------------------------------
# Deterministic parameter construction (xavier_normal_ shapes from __init__)
# -----------------------------------------------------------------------------
def _xavier_normal(key, shape):
    fan_out, fan_in = shape[0], int(np.prod(shape[1:]))
    std = math.sqrt(2.0 / (fan_in + fan_out))
    return std * jax.random.normal(key, shape, dtype=jnp.float32)


def make_params(key, input_dim, layer_sizes):
    ws, bs, us = [], [], []
    key, k = jax.random.split(key)
    ws.append(_xavier_normal(k, (layer_sizes[0], input_dim)))
    key, k = jax.random.split(key)
    bs.append(_xavier_normal(k, (layer_sizes[0], 1)))
    for i in range(1, len(layer_sizes)):
        key, k = jax.random.split(key)
        ws.append(_xavier_normal(k, (layer_sizes[i], input_dim)))
        key, k = jax.random.split(key)
        bs.append(_xavier_normal(k, (layer_sizes[i], 1)))
        key, k = jax.random.split(key)
        us.append(_xavier_normal(k, (layer_sizes[i], layer_sizes[i - 1])))
    return ws, bs, us, key


if __name__ == "__main__":
    # Small shapes consistent with the module: x is (N, dim).
    DIM = 16
    LAYER_SIZES = (32, 32, 8)
    N = 1024           # auto-tiled into 2 parallel steps of 512 (both v7x TCs)
    D = 0.1            # smooth_relu_thresh
    EPS = 0.001

    key = jax.random.PRNGKey(0)
    ws, bs, us, key = make_params(key, DIM, LAYER_SIZES)

    key, kx, kt = jax.random.split(key, 3)
    x = jax.random.normal(kx, (N, DIM), dtype=jnp.float32)
    # TODO(synk): original loads ./data/target_100.npy; generated deterministically here.
    target = jax.random.normal(kt, (1, DIM), dtype=jnp.float32)

    out = icnn_forward(x, target, ws, bs, us, d=D, eps=EPS)
    out = jax.block_until_ready(out)

    ref = _forward_ref(x, target, ws, bs, us, d=D, eps=EPS)
    # Kernel and XLA reference both use the TPU's reduced-precision matmul
    # passes; observed worst-case relative delta is ~1e-4, so compare with
    # tolerance that has margin over that (semantics are identical).
    np.testing.assert_allclose(np.asarray(out), np.asarray(ref),
                               rtol=5e-4, atol=2e-5)

    print("KERNEL_OK")
</pallas_src>

<mosaic_0001>
module attributes {stable_mosaic.version = 11 : i64} {
  func.func @_icnn_forward_kernel(%arg0: i32, %arg1: memref<16x512xf32, #tpu.memory_space<vmem>>, %arg2: memref<16x1xf32, #tpu.memory_space<vmem>>, %arg3: memref<8x1xf32, #tpu.memory_space<vmem>>, %arg4: memref<72x16xf32, #tpu.memory_space<vmem>>, %arg5: memref<72x1xf32, #tpu.memory_space<vmem>>, %arg6: memref<32x32xf32, #tpu.memory_space<vmem>>, %arg7: memref<8x32xf32, #tpu.memory_space<vmem>>, %arg8: memref<8x512xf32, #tpu.memory_space<vmem>>) attributes {dimension_semantics = [#tpu.dimension_semantics<parallel>], iteration_bounds = array<i64: 2>, scalar_prefetch = 0 : i64, scratch_operands = 0 : i64, tpu.core_type = #tpu.core_type<tc>, window_params = [{transform_indices = @transform_0, window_bounds = array<i64: 16, 512>}, {pipeline_mode = #tpu.pipeline_mode<synchronous>, transform_indices = @transform_1, window_bounds = array<i64: 16, 1>}, {pipeline_mode = #tpu.pipeline_mode<synchronous>, transform_indices = @transform_2, window_bounds = array<i64: 8, 1>}, {pipeline_mode = #tpu.pipeline_mode<synchronous>, transform_indices = @transform_3, window_bounds = array<i64: 72, 16>}, {pipeline_mode = #tpu.pipeline_mode<synchronous>, transform_indices = @transform_4, window_bounds = array<i64: 72, 1>}, {pipeline_mode = #tpu.pipeline_mode<synchronous>, transform_indices = @transform_5, window_bounds = array<i64: 32, 32>}, {pipeline_mode = #tpu.pipeline_mode<synchronous>, transform_indices = @transform_6, window_bounds = array<i64: 8, 32>}, {transform_indices = @transform_7, window_bounds = array<i64: 8, 512>}]} {
    %c0 = arith.constant 0 : index
    %c0_0 = arith.constant 0 : index
    %0 = vector.load %arg1[%c0, %c0_0] : memref<16x512xf32, #tpu.memory_space<vmem>>, vector<16x512xf32>
    %c0_1 = arith.constant 0 : index
    %c0_2 = arith.constant 0 : index
    %1 = vector.load %arg4[%c0_1, %c0_2] : memref<72x16xf32, #tpu.memory_space<vmem>>, vector<72x16xf32>
    %cst = arith.constant dense<0.000000e+00> : vector<72x512xf32>
    %2 = tpu.matmul %1, %0, %cst {dimension_numbers = #tpu.dot_dimension_numbers<[1], [0], [0], [1], [0, 0, 1, 1], [], []>} : vector<72x16xf32>, vector<16x512xf32>, vector<72x512xf32> -> vector<72x512xf32>
    %c0_3 = arith.constant 0 : index
    %c0_4 = arith.constant 0 : index
    %3 = vector.load %arg5[%c0_3, %c0_4] : memref<72x1xf32, #tpu.memory_space<vmem>>, vector<72x1xf32>
    %4 = vector.broadcast %3 : vector<72x1xf32> to vector<72x512xf32>
    %5 = arith.addf %2, %4 : vector<72x512xf32>
    %6 = vector.extract_strided_slice %5 {offsets = [0, 0], sizes = [32, 512], strides = [1, 1]} : vector<72x512xf32> to vector<32x512xf32>
    %cst_5 = arith.constant 0.000000e+00 : f32
    %7 = vector.broadcast %cst_5 : f32 to vector<32x512xf32>
    %8 = arith.maximumf %6, %7 : vector<32x512xf32>
    %cst_6 = arith.constant 1.000000e-01 : f32
    %9 = vector.broadcast %cst_6 : f32 to vector<32x512xf32>
    %10 = arith.cmpf olt, %8, %9 : vector<32x512xf32>
    %11 = arith.mulf %8, %8 : vector<32x512xf32>
    %cst_7 = arith.constant 2.000000e-01 : f32
    %12 = vector.broadcast %cst_7 : f32 to vector<32x512xf32>
    %13 = arith.divf %11, %12 : vector<32x512xf32>
    %cst_8 = arith.constant 5.000000e-02 : f32
    %14 = vector.broadcast %cst_8 : f32 to vector<32x512xf32>
    %15 = arith.subf %6, %14 : vector<32x512xf32>
    %16 = arith.select %10, %13, %15 : vector<32x512xi1>, vector<32x512xf32>
    %17 = vector.extract_strided_slice %5 {offsets = [32, 0], sizes = [32, 512], strides = [1, 1]} : vector<72x512xf32> to vector<32x512xf32>
    %c0_9 = arith.constant 0 : index
    %c0_10 = arith.constant 0 : index
    %18 = vector.load %arg6[%c0_9, %c0_10] : memref<32x32xf32, #tpu.memory_space<vmem>>, vector<32x32xf32>
    %cst_11 = arith.constant dense<0.000000e+00> : vector<32x512xf32>
    %19 = tpu.matmul %18, %16, %cst_11 {dimension_numbers = #tpu.dot_dimension_numbers<[1], [0], [0], [1], [0, 0, 1, 1], [], []>} : vector<32x32xf32>, vector<32x512xf32>, vector<32x512xf32> -> vector<32x512xf32>
    %20 = arith.addf %17, %19 : vector<32x512xf32>
    %cst_12 = arith.constant 0.000000e+00 : f32
    %21 = vector.broadcast %cst_12 : f32 to vector<32x512xf32>
    %22 = arith.maximumf %20, %21 : vector<32x512xf32>
    %cst_13 = arith.constant 1.000000e-01 : f32
    %23 = vector.broadcast %cst_13 : f32 to vector<32x512xf32>
    %24 = arith.cmpf olt, %22, %23 : vector<32x512xf32>
    %25 = arith.mulf %22, %22 : vector<32x512xf32>
    %cst_14 = arith.constant 2.000000e-01 : f32
    %26 = vector.broadcast %cst_14 : f32 to vector<32x512xf32>
    %27 = arith.divf %25, %26 : vector<32x512xf32>
    %cst_15 = arith.constant 5.000000e-02 : f32
    %28 = vector.broadcast %cst_15 : f32 to vector<32x512xf32>
    %29 = arith.subf %20, %28 : vector<32x512xf32>
    %30 = arith.select %24, %27, %29 : vector<32x512xi1>, vector<32x512xf32>
    %31 = vector.extract_strided_slice %5 {offsets = [64, 0], sizes = [8, 512], strides = [1, 1]} : vector<72x512xf32> to vector<8x512xf32>
    %c0_16 = arith.constant 0 : index
    %c0_17 = arith.constant 0 : index
    %32 = vector.load %arg7[%c0_16, %c0_17] : memref<8x32xf32, #tpu.memory_space<vmem>>, vector<8x32xf32>
    %cst_18 = arith.constant dense<0.000000e+00> : vector<8x512xf32>
    %33 = tpu.matmul %32, %30, %cst_18 {dimension_numbers = #tpu.dot_dimension_numbers<[1], [0], [0], [1], [0, 0, 1, 1], [], []>} : vector<8x32xf32>, vector<32x512xf32>, vector<8x512xf32> -> vector<8x512xf32>
    %34 = arith.addf %31, %33 : vector<8x512xf32>
    %cst_19 = arith.constant 0.000000e+00 : f32
    %35 = vector.broadcast %cst_19 : f32 to vector<8x512xf32>
    %36 = arith.maximumf %34, %35 : vector<8x512xf32>
    %cst_20 = arith.constant 1.000000e-01 : f32
    %37 = vector.broadcast %cst_20 : f32 to vector<8x512xf32>
    %38 = arith.cmpf olt, %36, %37 : vector<8x512xf32>
    %39 = arith.mulf %36, %36 : vector<8x512xf32>
    %cst_21 = arith.constant 2.000000e-01 : f32
    %40 = vector.broadcast %cst_21 : f32 to vector<8x512xf32>
    %41 = arith.divf %39, %40 : vector<8x512xf32>
    %cst_22 = arith.constant 5.000000e-02 : f32
    %42 = vector.broadcast %cst_22 : f32 to vector<8x512xf32>
    %43 = arith.subf %34, %42 : vector<8x512xf32>
    %44 = arith.select %38, %41, %43 : vector<8x512xi1>, vector<8x512xf32>
    %c0_23 = arith.constant 0 : index
    %c0_24 = arith.constant 0 : index
    %45 = vector.load %arg2[%c0_23, %c0_24] : memref<16x1xf32, #tpu.memory_space<vmem>>, vector<16x1xf32>
    %46 = vector.broadcast %45 : vector<16x1xf32> to vector<16x512xf32>
    %47 = arith.subf %0, %46 : vector<16x512xf32>
    %48 = arith.mulf %47, %47 : vector<16x512xf32>
    %cst_25 = arith.constant dense<0.000000e+00> : vector<512xf32>
    %49 = vector.multi_reduction <add>, %48, %cst_25 [0] : vector<16x512xf32> to vector<512xf32>
    %50 = vector.shape_cast %49 : vector<512xf32> to vector<1x512xf32>
    %cst_26 = arith.constant 1.000000e-03 : f32
    %51 = vector.broadcast %cst_26 : f32 to vector<1x512xf32>
    %52 = arith.mulf %51, %50 : vector<1x512xf32>
    %c0_27 = arith.constant 0 : index
    %c0_28 = arith.constant 0 : index
    %53 = vector.load %arg3[%c0_27, %c0_28] : memref<8x1xf32, #tpu.memory_space<vmem>>, vector<8x1xf32>
    %54 = vector.broadcast %53 : vector<8x1xf32> to vector<8x512xf32>
    %55 = arith.subf %44, %54 : vector<8x512xf32>
    %cst_29 = arith.constant 0.000000e+00 : f32
    %56 = vector.broadcast %cst_29 : f32 to vector<8x512xf32>
    %57 = arith.maximumf %55, %56 : vector<8x512xf32>
    %cst_30 = arith.constant 1.000000e-01 : f32
    %58 = vector.broadcast %cst_30 : f32 to vector<8x512xf32>
    %59 = arith.cmpf olt, %57, %58 : vector<8x512xf32>
    %60 = arith.mulf %57, %57 : vector<8x512xf32>
    %cst_31 = arith.constant 2.000000e-01 : f32
    %61 = vector.broadcast %cst_31 : f32 to vector<8x512xf32>
    %62 = arith.divf %60, %61 : vector<8x512xf32>
    %cst_32 = arith.constant 5.000000e-02 : f32
    %63 = vector.broadcast %cst_32 : f32 to vector<8x512xf32>
    %64 = arith.subf %55, %63 : vector<8x512xf32>
    %65 = arith.select %59, %62, %64 : vector<8x512xi1>, vector<8x512xf32>
    %66 = vector.broadcast %52 : vector<1x512xf32> to vector<8x512xf32>
    %67 = arith.addf %65, %66 : vector<8x512xf32>
    %c0_33 = arith.constant 0 : index
    %c0_34 = arith.constant 0 : index
    %68 = vector.load %arg8[%c0_33, %c0_34] : memref<8x512xf32, #tpu.memory_space<vmem>>, vector<8x512xf32>
    tpu.vector_store %arg8[%c0_33, %c0_34], %67 {strides = array<i32>} : memref<8x512xf32, #tpu.memory_space<vmem>>, vector<8x512xf32>,
    return
  }
  func.func @transform_0(%arg0: i32) -> (i32, i32) {
    %c0_i32 = arith.constant 0 : i32
    %c0_i32_0 = arith.constant 0 : i32
    return %c0_i32, %arg0 : i32, i32
  }
  func.func @transform_1(%arg0: i32) -> (i32, i32) {
    %c0_i32 = arith.constant 0 : i32
    %c0_i32_0 = arith.constant 0 : i32
    %c0_i32_1 = arith.constant 0 : i32
    return %c0_i32, %c0_i32_0 : i32, i32
  }
  func.func @transform_2(%arg0: i32) -> (i32, i32) {
    %c0_i32 = arith.constant 0 : i32
    %c0_i32_0 = arith.constant 0 : i32
    %c0_i32_1 = arith.constant 0 : i32
    return %c0_i32, %c0_i32_0 : i32, i32
  }
  func.func @transform_3(%arg0: i32) -> (i32, i32) {
    %c0_i32 = arith.constant 0 : i32
    %c0_i32_0 = arith.constant 0 : i32
    %c0_i32_1 = arith.constant 0 : i32
    return %c0_i32, %c0_i32_0 : i32, i32
  }
  func.func @transform_4(%arg0: i32) -> (i32, i32) {
    %c0_i32 = arith.constant 0 : i32
    %c0_i32_0 = arith.constant 0 : i32
    %c0_i32_1 = arith.constant 0 : i32
    return %c0_i32, %c0_i32_0 : i32, i32
  }
  func.func @transform_5(%arg0: i32) -> (i32, i32) {
    %c0_i32 = arith.constant 0 : i32
    %c0_i32_0 = arith.constant 0 : i32
    %c0_i32_1 = arith.constant 0 : i32
    return %c0_i32, %c0_i32_0 : i32, i32
  }
  func.func @transform_6(%arg0: i32) -> (i32, i32) {
    %c0_i32 = arith.constant 0 : i32
    %c0_i32_0 = arith.constant 0 : i32
    %c0_i32_1 = arith.constant 0 : i32
    return %c0_i32, %c0_i32_0 : i32, i32
  }
  func.func @transform_7(%arg0: i32) -> (i32, i32) {
    %c0_i32 = arith.constant 0 : i32
    %c0_i32_0 = arith.constant 0 : i32
    return %c0_i32, %arg0 : i32, i32
  }
}

</mosaic_0001>

<llo_original>
// kernel: icnn_forward.1
$region0: #{icnn_forward.1}
  #allocation0 [shape = 'u32[]', space=smem, size = 0x4, offset = 0x4, fixed_abs, tag = 'smem constant byte address 0x4 - core index']
  #allocation1 [shape = 'u32[144,128]{1,0:T(1,128)}', space=vmem, size = 0x12000, scoped, tag = 'internal scratch']
  %s0 = inlined_call_operand.vmem [shape: f32[16,1024], index: 0, kind: input, shape index: {}]
  %s1 = inlined_call_operand.vmem [shape: f32[16,1], index: 1, kind: input, shape index: {}]
  %s2 = inlined_call_operand.vmem [shape: f32[8,1], index: 2, kind: input, shape index: {}]
  %s3 = inlined_call_operand.vmem [shape: f32[72,16], index: 3, kind: input, shape index: {}]
  %s4 = inlined_call_operand.vmem [shape: f32[72,1], index: 4, kind: input, shape index: {}]
  %s5 = inlined_call_operand.vmem [shape: f32[32,32], index: 5, kind: input, shape index: {}]
  %s6 = inlined_call_operand.vmem [shape: f32[8,32], index: 6, kind: input, shape index: {}]
  %s7 = inlined_call_operand.hbm [shape: f32[8,1024], index: 7, kind: output, shape index: {}]
  %s8 = sld [smem:[#allocation0]]
  $region84: #{icnn_forward.1} parent=0
    _
  %s10 = ssub.s32 1, %s8
  %s11 = scalar_select 0, %s10, %s8
  $region1: #{icnn_forward.1} parent=0
    #allocation2 [shape = 'u8[65536]{0}', space=vmem, size = 0x10000, scoped, tag = 'input window, operand 0']
    #allocation3 [shape = 'u8[32768]{0}', space=vmem, size = 0x8000, scoped, tag = 'output window, operand 0']
    #allocation4 [shape = 's32[2]{0}', space=sflag, size = 0x8, scoped, tag = 'scoped memory for icnn_forward.1']
    %12 = vsyncpa [#allocation4], 0
    %s13 = scalar_lea.sflag [#allocation4], 1
    %14 = vsyncpa %s13, 0
    loop: start=0, step=1, limit=4
    $region2: #{icnn_forward.1} parent=1 // loop_pre_header
      _
    $region3: #{icnn_forward.1} parent=1 // loop_header
      %s16 = sphi 0, %s20
      %p17 = scmp.ge.s32.totalorder %s16, 4
      %s26 = sphi 0, %s28
      %s29 = sphi 0, %s26
      %s30 = sphi 0, %s29
      %s46 = sphi 0, %s30
      %s50 = sphi 0, %s50
      %s52 = sphi 0, %s50
      %s53 = sphi 0, %s52
      %s67 = sphi 0, %s53
      %s71 = sphi 0, %s71
      %s73 = sphi 0, %s71
      %s74 = sphi 0, %s73
      %s88 = sphi 0, %s74
      %s92 = sphi 0, %s92
      %s94 = sphi 0, %s92
      %s95 = sphi 0, %s94
      %s109 = sphi 0, %s95
      %s113 = sphi 0, %s113
      %s115 = sphi 0, %s113
      %s116 = sphi 0, %s115
      %s130 = sphi 0, %s116
      %s134 = sphi 0, %s134
      %s136 = sphi 0, %s134
      %s137 = sphi 0, %s136
      %s151 = sphi 0, %s137
      %s155 = sphi 0, %s155
      %s157 = sphi 0, %s155
      %s158 = sphi 0, %s157
      %s172 = sphi 0, %s158
      %s178 = sphi 0, %s180
      %s181 = sphi 0, %s178
      %s182 = sphi 0, %s181
      %s198 = sphi 0, %s182
    $region4: #{icnn_forward.1} parent=1 // loop_header_branch
      %19 = sbr.rel (%p17) target = $region8
    $region5: #{icnn_forward.1} parent=1 // loop_body
      %s21 = ssub.s32 %s16, 1
      %s22 = ssub.s32 %s16, 2
      %s23 = sadd.s32 %s16, 1
      %s24 = ssub.s32 %s16, %s23
      %p25 = scmp.eq.s32.totalorder %s24, 0
      %s27 = sadd.s32 %s26, 1
      %s28 = scalar_select %p25, %s26, %s27
      %p31 = pneg %p25
      %p32 = scmp.eq.s32.totalorder %s16, 1
      %p33 = por %p31, %p32
      %p34 = scmp.ne.s32.totalorder %s26, %s29
      %p35 = scmp.eq.s32.totalorder %s16, 0
      %p36 = por %p34, %p35
      %p37 = scmp.ne.s32.totalorder %s26, %s29
      %p38 = scmp.eq.s32.totalorder %s21, 1
      %p39 = por %p37, %p38
      %p40 = scmp.ne.s32.totalorder %s29, %s30
      %p41 = scmp.eq.s32.totalorder %s21, 0
      %p42 = por %p40, %p41
      %p43 = scmp.ne.s32.totalorder %s29, %s30
      %p44 = scmp.eq.s32.totalorder %s22, 1
      %p45 = por %p43, %p44
      %p47 = scmp.ne.s32.totalorder %s30, %s46
      %p48 = scmp.eq.s32.totalorder %s22, 0
      %p49 = por %p47, %p48
      %s51 = sadd.s32 %s50, 1
      %p54 = scmp.eq.s32.totalorder %s16, 1
      %p55 = scmp.ne.s32.totalorder %s50, %s52
      %p56 = scmp.eq.s32.totalorder %s16, 0
      %p57 = por %p55, %p56
      %p58 = scmp.ne.s32.totalorder %s50, %s52
      %p59 = scmp.eq.s32.totalorder %s21, 1
      %p60 = por %p58, %p59
      %p61 = scmp.ne.s32.totalorder %s52, %s53
      %p62 = scmp.eq.s32.totalorder %s21, 0
      %p63 = por %p61, %p62
      %p64 = scmp.ne.s32.totalorder %s52, %s53
      %p65 = scmp.eq.s32.totalorder %s22, 1
      %p66 = por %p64, %p65
      %p68 = scmp.ne.s32.totalorder %s53, %s67
      %p69 = scmp.eq.s32.totalorder %s22, 0
      %p70 = por %p68, %p69
      %s72 = sadd.s32 %s71, 1
      %p75 = scmp.eq.s32.totalorder %s16, 1
      %p76 = scmp.ne.s32.totalorder %s71, %s73
      %p77 = scmp.eq.s32.totalorder %s16, 0
      %p78 = por %p76, %p77
      %p79 = scmp.ne.s32.totalorder %s71, %s73
      %p80 = scmp.eq.s32.totalorder %s21, 1
      %p81 = por %p79, %p80
      %p82 = scmp.ne.s32.totalorder %s73, %s74
      %p83 = scmp.eq.s32.totalorder %s21, 0
      %p84 = por %p82, %p83
      %p85 = scmp.ne.s32.totalorder %s73, %s74
      %p86 = scmp.eq.s32.totalorder %s22, 1
      %p87 = por %p85, %p86
      %p89 = scmp.ne.s32.totalorder %s74, %s88
      %p90 = scmp.eq.s32.totalorder %s22, 0
      %p91 = por %p89, %p90
      %s93 = sadd.s32 %s92, 1
      %p96 = scmp.eq.s32.totalorder %s16, 1
      %p97 = scmp.ne.s32.totalorder %s92, %s94
      %p98 = scmp.eq.s32.totalorder %s16, 0
      %p99 = por %p97, %p98
      %p100 = scmp.ne.s32.totalorder %s92, %s94
      %p101 = scmp.eq.s32.totalorder %s21, 1
      %p102 = por %p100, %p101
      %p103 = scmp.ne.s32.totalorder %s94, %s95
      %p104 = scmp.eq.s32.totalorder %s21, 0
      %p105 = por %p103, %p104
      %p106 = scmp.ne.s32.totalorder %s94, %s95
      %p107 = scmp.eq.s32.totalorder %s22, 1
      %p108 = por %p106, %p107
      %p110 = scmp.ne.s32.totalorder %s95, %s109
      %p111 = scmp.eq.s32.totalorder %s22, 0
      %p112 = por %p110, %p111
      %s114 = sadd.s32 %s113, 1
      %p117 = scmp.eq.s32.totalorder %s16, 1
      %p118 = scmp.ne.s32.totalorder %s113, %s115
      %p119 = scmp.eq.s32.totalorder %s16, 0
      %p120 = por %p118, %p119
      %p121 = scmp.ne.s32.totalorder %s113, %s115
      %p122 = scmp.eq.s32.totalorder %s21, 1
      %p123 = por %p121, %p122
      %p124 = scmp.ne.s32.totalorder %s115, %s116
      %p125 = scmp.eq.s32.totalorder %s21, 0
      %p126 = por %p124, %p125
      %p127 = scmp.ne.s32.totalorder %s115, %s116
      %p128 = scmp.eq.s32.totalorder %s22, 1
      %p129 = por %p127, %p128
      %p131 = scmp.ne.s32.totalorder %s116, %s130
      %p132 = scmp.eq.s32.totalorder %s22, 0
      %p133 = por %p131, %p132
      %s135 = sadd.s32 %s134, 1
      %p138 = scmp.eq.s32.totalorder %s16, 1
      %p139 = scmp.ne.s32.totalorder %s134, %s136
      %p140 = scmp.eq.s32.totalorder %s16, 0
      %p141 = por %p139, %p140
      %p142 = scmp.ne.s32.totalorder %s134, %s136
      %p143 = scmp.eq.s32.totalorder %s21, 1
      %p144 = por %p142, %p143
      %p145 = scmp.ne.s32.totalorder %s136, %s137
      %p146 = scmp.eq.s32.totalorder %s21, 0
      %p147 = por %p145, %p146
      %p148 = scmp.ne.s32.totalorder %s136, %s137
      %p149 = scmp.eq.s32.totalorder %s22, 1
      %p150 = por %p148, %p149
      %p152 = scmp.ne.s32.totalorder %s137, %s151
      %p153 = scmp.eq.s32.totalorder %s22, 0
      %p154 = por %p152, %p153
      %s156 = sadd.s32 %s155, 1
      %p159 = scmp.eq.s32.totalorder %s16, 1
      %p160 = scmp.ne.s32.totalorder %s155, %s157
      %p161 = scmp.eq.s32.totalorder %s16, 0
      %p162 = por %p160, %p161
      %p163 = scmp.ne.s32.totalorder %s155, %s157
      %p164 = scmp.eq.s32.totalorder %s21, 1
      %p165 = por %p163, %p164
      %p166 = scmp.ne.s32.totalorder %s157, %s158
      %p167 = scmp.eq.s32.totalorder %s21, 0
      %p168 = por %p166, %p167
      %p169 = scmp.ne.s32.totalorder %s157, %s158
      %p170 = scmp.eq.s32.totalorder %s22, 1
      %p171 = por %p169, %p170
      %p173 = scmp.ne.s32.totalorder %s158, %s172
      %p174 = scmp.eq.s32.totalorder %s22, 0
      %p175 = por %p173, %p174
      %s176 = ssub.s32 %s16, %s23
      %p177 = scmp.eq.s32.totalorder %s176, 0
      %s179 = sadd.s32 %s178, 1
      %s180 = scalar_select %p177, %s178, %s179
      %p183 = pneg %p177
      %p184 = scmp.eq.s32.totalorder %s16, 1
      %p185 = por %p183, %p184
      %p186 = scmp.ne.s32.totalorder %s178, %s181
      %p187 = scmp.eq.s32.totalorder %s16, 0
      %p188 = por %p186, %p187
      %p189 = scmp.ne.s32.totalorder %s178, %s181
      %p190 = scmp.eq.s32.totalorder %s21, 1
      %p191 = por %p189, %p190
      %p192 = scmp.ne.s32.totalorder %s181, %s182
      %p193 = scmp.eq.s32.totalorder %s21, 0
      %p194 = por %p192, %p193
      %p195 = scmp.ne.s32.totalorder %s181, %s182
      %p196 = scmp.eq.s32.totalorder %s22, 1
      %p197 = por %p195, %p196
      %p199 = scmp.ne.s32.totalorder %s182, %s198
      %p200 = scmp.eq.s32.totalorder %s22, 0
      %p201 = por %p199, %p200
      %p202 = scmp.le.s32.totalorder 1, %s16
      %p203 = scmp.lt.s32.totalorder %s16, 3
      %p204 = pnand %p202, %p203
      %p205 = pneg %p204
      // Predicated region
      $region9: #{icnn_forward.1} parent=5 // pred_check
        _
      $region10: #{icnn_forward.1} parent=5 // pred_check_branch
        %207 = sbr.rel (%p204) target = $region12
      $region11: #{icnn_forward.1} parent=5 // pred_region
        %s208 = ssub.s32 %s16, 1
        // Predicated region
        $region13: #{icnn_forward.1} parent=11 // pred_check
          %p209 = pneg %p63
        $region14: #{icnn_forward.1} parent=11 // pred_check_branch
          %211 = sbr.rel (%p209) target = $region16
        $region15: #{icnn_forward.1} parent=11 // pred_region
          _
        $region16: #{icnn_forward.1} parent=11 // pred_fallthru
          _
        // Predicated region
        $region17: #{icnn_forward.1} parent=11 // pred_check
          %p212 = pneg %p84
        $region18: #{icnn_forward.1} parent=11 // pred_check_branch
          %214 = sbr.rel (%p212) target = $region20
        $region19: #{icnn_forward.1} parent=11 // pred_region
          _
        $region20: #{icnn_forward.1} parent=11 // pred_fallthru
          _
        // Predicated region
        $region21: #{icnn_forward.1} parent=11 // pred_check
          %p215 = pneg %p105
        $region22: #{icnn_forward.1} parent=11 // pred_check_branch
          %217 = sbr.rel (%p215) target = $region24
        $region23: #{icnn_forward.1} parent=11 // pred_region
          _
        $region24: #{icnn_forward.1} parent=11 // pred_fallthru
          _
        // Predicated region
        $region25: #{icnn_forward.1} parent=11 // pred_check
          %p218 = pneg %p126
        $region26: #{icnn_forward.1} parent=11 // pred_check_branch
          %220 = sbr.rel (%p218) target = $region28
        $region27: #{icnn_forward.1} parent=11 // pred_region
          _
        $region28: #{icnn_forward.1} parent=11 // pred_fallthru
          _
        // Predicated region
        $region29: #{icnn_forward.1} parent=11 // pred_check
          %p221 = pneg %p147
        $region30: #{icnn_forward.1} parent=11 // pred_check_branch
          %223 = sbr.rel (%p221) target = $region32
        $region31: #{icnn_forward.1} parent=11 // pred_region
          _
        $region32: #{icnn_forward.1} parent=11 // pred_fallthru
          _
        // Predicated region
        $region33: #{icnn_forward.1} parent=11 // pred_check
          %p224 = pneg %p168
        $region34: #{icnn_forward.1} parent=11 // pred_check_branch
          %226 = sbr.rel (%p224) target = $region36
        $region35: #{icnn_forward.1} parent=11 // pred_region
          _
        $region36: #{icnn_forward.1} parent=11 // pred_fallthru
          _
      $region12: #{icnn_forward.1} parent=5 // pred_fallthru
        _
      %p227 = scmp.lt.s32.totalorder %s16, 2
      // Predicated region
      $region37: #{icnn_forward.1} parent=5 // pred_check
        %p228 = pneg %p227
      $region38: #{icnn_forward.1} parent=5 // pred_check_branch
        %230 = sbr.rel (%p228) target = $region40
      $region39: #{icnn_forward.1} parent=5 // pred_region
        // Predicated region
        $region41: #{icnn_forward.1} parent=39 // pred_check
          %p231 = pneg %p36
        $region42: #{icnn_forward.1} parent=39 // pred_check_branch
          %233 = sbr.rel (%p231) target = $region44
        $region43: #{icnn_forward.1} parent=39 // pred_region
          %s234 = sand.u32 %s26, 1
          %s235 = sand.u32 %s26, 1
          %s236 = smul.addr %s235, 64
          %s237 = scalar_lea.vmem [#allocation2], %s236
          %s238 = smul.u32 4, %s16
          %s239 = smul.addr %s238, 8
          %s240 = scalar_lea.vmem %s0, %s239
          // Predicated region
          $region45: #{icnn_forward.1} parent=43 // pred_check
            _
          $region46: #{icnn_forward.1} parent=43 // pred_check_branch
            %242 = sbr.rel (0) target = $region48
          $region47: #{icnn_forward.1} parent=43 // pred_region
            // Predicated region
            $region49: #{icnn_forward.1} parent=47 // pred_check
              _
            $region50: #{icnn_forward.1} parent=47 // pred_check_branch
              %244 = sbr.rel (0) target = $region52
            $region51: #{icnn_forward.1} parent=47 // pred_region
              loop: start=0, step=1, limit=1
              $region53: #{icnn_forward.1} parent=51 // loop_pre_header
                _
              $region54: #{icnn_forward.1} parent=51 // loop_header
                %s246 = sphi 0, %s250
                %p247 = scmp.ge.s32.totalorder %s246, 1
                %s251 = sphi %s240, %s240
                %s252 = sphi %s237, %s237
              $region55: #{icnn_forward.1} parent=51 // loop_header_branch
                %249 = sbr.rel (%p247) target = $region59
              $region56: #{icnn_forward.1} parent=51 // loop_body
                %v253 = vld [vmem:[%s251] sm:$0xff]
                %254 = vst [vmem:[%s252] sm:$0xff] %v253
                %v255 = vld [vmem:[%s251 + $0x8] sm:$0xff]
                %256 = vst [vmem:[%s252 + $0x8] sm:$0xff] %v255
                %v257 = vld [vmem:[%s251 + $0x10] sm:$0xff]
                %258 = vst [vmem:[%s252 + $0x10] sm:$0xff] %v257
                %v259 = vld [vmem:[%s251 + $0x18] sm:$0xff]
                %260 = vst [vmem:[%s252 + $0x18] sm:$0xff] %v259
                %v261 = vld [vmem:[%s251 + $0x40] sm:$0xff]
                %262 = vst [vmem:[%s252 + $0x20] sm:$0xff] %v261
                %v263 = vld [vmem:[%s251 + $0x48] sm:$0xff]
                %264 = vst [vmem:[%s252 + $0x28] sm:$0xff] %v263
                %v265 = vld [vmem:[%s251 + $0x50] sm:$0xff]
                %266 = vst [vmem:[%s252 + $0x30] sm:$0xff] %v265
                %v267 = vld [vmem:[%s251 + $0x58] sm:$0xff]
                %268 = vst [vmem:[%s252 + $0x38] sm:$0xff] %v267
              $region57: #{icnn_forward.1} parent=51 // loop_footer
                %s250 = sadd.s32 1, %s246
              $region58: #{icnn_forward.1} parent=51 // loop_footer_branch
                %245 = sbr.rel target = $region54
              $region59: #{icnn_forward.1} parent=51 // loop_exit
                _
            $region52: #{icnn_forward.1} parent=47 // pred_fallthru
              _
            // Predicated region
            $region60: #{icnn_forward.1} parent=47 // pred_check
              _
            $region61: #{icnn_forward.1} parent=47 // pred_check_branch
              %270 = sbr.rel target = $region63
            $region62: #{icnn_forward.1} parent=47 // pred_region
              _
            $region63: #{icnn_forward.1} parent=47 // pred_fallthru
              _
          $region48: #{icnn_forward.1} parent=43 // pred_fallthru
            _
          %271 = vnop
        $region44: #{icnn_forward.1} parent=39 // pred_fallthru
          _
      $region40: #{icnn_forward.1} parent=5 // pred_fallthru
        _
      %p272 = scmp.le.s32.totalorder 1, %s16
      %p273 = scmp.lt.s32.totalorder %s16, 3
      %p274 = pnand %p272, %p273
      %p275 = pneg %p274
      // Predicated region
      $region64: #{icnn_forward.1} parent=5 // pred_check
        _
      $region65: #{icnn_forward.1} parent=5 // pred_check_branch
        %277 = sbr.rel (%p274) target = $region67
      $region66: #{icnn_forward.1} parent=5 // pred_region
        %s278 = ssub.s32 %s16, 1
        %s279 = sand.u32 %s29, 1
        %s280 = sand.u32 %s29, 1
        %s281 = smul.addr %s280, 64
        %s282 = scalar_lea.vmem [#allocation2], %s281
        // Predicated region
        $region68: #{icnn_forward.1} parent=66 // pred_check
          %p283 = pneg %p42
        $region69: #{icnn_forward.1} parent=66 // pred_check_branch
          %285 = sbr.rel (%p283) target = $region71
        $region70: #{icnn_forward.1} parent=66 // pred_region
          _
        $region71: #{icnn_forward.1} parent=66 // pred_fallthru
          _
        %s286 = sand.u32 %s29, 1
        %s287 = sand.u32 %s29, 1
        %s288 = smul.addr %s287, 64
        %s289 = scalar_lea.vmem [#allocation2], %s288
        %p290 = pneg %p42
        %p291 = pneg %p39
        %p292 = pneg %p63
        %p293 = pneg %p60
        %p294 = pneg %p84
        %p295 = pneg %p81
        %p296 = pneg %p105
        %p297 = pneg %p102
        %p298 = pneg %p126
        %p299 = pneg %p123
        %p300 = pneg %p147
        %p301 = pneg %p144
        %p302 = pneg %p168
        %p303 = pneg %p165
        %p304 = pneg %p194
        %p305 = pneg %p191
        %s306 = sand.u32 %s181, 1
        %s307 = scalar_lea.sflag [#allocation4], %s306
        %s308 = sand.u32 %s181, 1
        %s309 = smul.addr %s308, 32
        %s310 = scalar_lea.vmem [#allocation3], %s309
        %s311 = smul.u32 4, %s21
        %s312 = smul.u32 4, %s21
        %v313 = vld [vmem:[%s282] sm:$0xff]
        %v314 = vld [vmem:[%s282 + $0x8] sm:$0xff]
        %v315 = vld [vmem:[%s282 + $0x10] sm:$0xff]
        %v316 = vld [vmem:[%s282 + $0x18] sm:$0xff]
        %v317 = vld [vmem:[%s282 + $0x20] sm:$0xff]
        %v318 = vld [vmem:[%s282 + $0x28] sm:$0xff]
        %v319 = vld [vmem:[%s282 + $0x30] sm:$0xff]
        %v320 = vld [vmem:[%s282 + $0x38] sm:$0xff]
        %v321 = vld [vmem:[%s3] sm:$0xff]
        %v322 = vld [vmem:[%s3 + $0x8] sm:$0xff]
        %v323 = vld [vmem:[%s3 + $0x10] sm:$0xff]
        %v324 = vld [vmem:[%s3 + $0x18] sm:$0xff]
        %v325 = vld [vmem:[%s3 + $0x20] sm:$0xff]
        %v326 = vld [vmem:[%s3 + $0x28] sm:$0xff]
        %v327 = vld [vmem:[%s3 + $0x30] sm:$0xff]
        %v328 = vld [vmem:[%s3 + $0x38] sm:$0xff]
        %v329 = vld [vmem:[%s3 + $0x40] sm:$0xff]
        %v330 = vld [vmem:[%s4] sm:$0xff]
        %v331 = vld [vmem:[%s4 + $0x8] sm:$0xff]
        %v332 = vld [vmem:[%s4 + $0x10] sm:$0xff]
        %v333 = vld [vmem:[%s4 + $0x18] sm:$0xff]
        %v334 = vld [vmem:[%s4 + $0x20] sm:$0xff]
        %v335 = vld [vmem:[%s4 + $0x28] sm:$0xff]
        %v336 = vld [vmem:[%s4 + $0x30] sm:$0xff]
        %v337 = vld [vmem:[%s4 + $0x38] sm:$0xff]
        %v338 = vld [vmem:[%s4 + $0x40] sm:$0xff]
        %340 = vset.pattern.permute.xlu0 0
        %341 = vperm.xlu0 %340, %v330
        %v342 = vpop.permute.xlu0 %341
        %345 = vset.pattern.permute.xlu0 0
        %346 = vperm.xlu0 %345, %v331
        %v347 = vpop.permute.xlu0 %346
        %350 = vset.pattern.permute.xlu0 0
        %351 = vperm.xlu0 %350, %v332
        %v352 = vpop.permute.xlu0 %351
        %355 = vset.pattern.permute.xlu0 0
        %356 = vperm.xlu0 %355, %v333
        %v357 = vpop.permute.xlu0 %356
        %360 = vset.pattern.permute.xlu0 0
        %361 = vperm.xlu0 %360, %v334
        %v362 = vpop.permute.xlu0 %361
        %365 = vset.pattern.permute.xlu0 0
        %366 = vperm.xlu0 %365, %v335
        %v367 = vpop.permute.xlu0 %366
        %370 = vset.pattern.permute.xlu0 0
        %371 = vperm.xlu0 %370, %v336
        %v372 = vpop.permute.xlu0 %371
        %375 = vset.pattern.permute.xlu0 0
        %376 = vperm.xlu0 %375, %v337
        %v377 = vpop.permute.xlu0 %376
        %380 = vset.pattern.permute.xlu0 0
        %381 = vperm.xlu0 %380, %v338
        %v382 = vpop.permute.xlu0 %381
        %vm384 = vcmask 130048
        %v386 = vsel %vm384, %v321, 0
        %v389 = vsel %vm384, %v322, 0
        %v392 = vsel %vm384, %v323, 0
        %v395 = vsel %vm384, %v324, 0
        %v398 = vsel %vm384, %v325, 0
        %v401 = vsel %vm384, %v326, 0
        %v404 = vsel %vm384, %v327, 0
        %v407 = vsel %vm384, %v328, 0
        %v410 = vsel %vm384, %v329, 0
        %412 = vmatprep.subr.mxu0 %v314
        %413 = vmatpush1.msra.mxu0 %v313
        %414 = vmatprep.subr.mxu0 %v318
        %415 = vmatpush1.msra.mxu0 %v317
        %416 = vmatprep.subr.mxu0 0.0
        %417 = vmatpush1.msra.mxu0 0.0
        %418 = vmatprep.subr.mxu0 0.0
        %419 = vmatpush1.msra.mxu0 0.0
        %420 = vmatprep.subr.mxu0 0.0
        %421 = vmatpush1.msra.mxu0 0.0
        %422 = vmatprep.subr.mxu0 0.0
        %423 = vmatpush1.msra.mxu0 0.0
        %424 = vmatprep.subr.mxu0 0.0
        %425 = vmatpush1.msra.mxu0 0.0
        %426 = vmatprep.subr.mxu0 0.0
        %427 = vmatpush1.msra.mxu0 0.0
        %428 = vmatprep.subr.mxu0 0.0
        %429 = vmatpush1.msra.mxu0 0.0
        %430 = vmatprep.subr.mxu0 0.0
        %431 = vmatpush1.msra.mxu0 0.0
        %432 = vmatprep.subr.mxu0 0.0
        %433 = vmatpush1.msra.mxu0 0.0
        %434 = vmatprep.subr.mxu0 0.0
        %435 = vmatpush1.msra.mxu0 0.0
        %436 = vmatprep.subr.mxu0 0.0
        %437 = vmatpush1.msra.mxu0 0.0
        %438 = vmatprep.subr.mxu0 0.0
        %439 = vmatpush1.msra.mxu0 0.0
        %440 = vmatprep.subr.mxu0 0.0
        %441 = vmatpush1.msra.mxu0 0.0
        %442 = vmatprep.subr.mxu0 0.0
        %443 = vmatpush1.msra.mxu0 0.0
        %444 = vmatprep.subr.mxu0 0.0
        %445 = vmatpush1.msra.mxu0 0.0
        %446 = vmatprep.subr.mxu0 0.0
        %447 = vmatpush1.msra.mxu0 0.0
        %448 = vmatprep.subr.mxu0 0.0
        %449 = vmatpush1.msra.mxu0 0.0
        %450 = vmatprep.subr.mxu0 0.0
        %451 = vmatpush1.msra.mxu0 0.0
        %452 = vmatprep.subr.mxu0 0.0
        %453 = vmatpush1.msra.mxu0 0.0
        %454 = vmatprep.subr.mxu0 0.0
        %455 = vmatpush1.msra.mxu0 0.0
        %456 = vmatprep.subr.mxu0 0.0
        %457 = vmatpush1.msra.mxu0 0.0
        %458 = vmatprep.subr.mxu0 0.0
        %459 = vmatpush1.msra.mxu0 0.0
        %460 = vmatprep.subr.mxu0 0.0
        %461 = vmatpush1.msra.mxu0 0.0
        %462 = vmatprep.subr.mxu0 0.0
        %463 = vmatpush1.msra.mxu0 0.0
        %464 = vmatprep.subr.mxu0 0.0
        %465 = vmatpush1.msra.mxu0 0.0
        %466 = vmatprep.subr.mxu0 0.0
        %467 = vmatpush1.msra.mxu0 0.0
        %468 = vmatprep.subr.mxu0 0.0
        %469 = vmatpush1.msra.mxu0 0.0
        %470 = vmatprep.subr.mxu0 0.0
        %471 = vmatpush1.msra.mxu0 0.0
        %472 = vmatprep.subr.mxu0 0.0
        %473 = vmatpush1.msra.mxu0 0.0
        %474 = vmatprep.subr.mxu0 0.0
        %475 = vmatpush1.msra.mxu0 0.0
        %476 = vmatprep.mubr.f32.mxu0 0.0
        %477 = vmatmul.mubr.f32.gmra.mrb[0].mxu0 %v386
        %v478 = vpop.f32.mrb[0].mxu0
        %v479 = vadd.f32 %v342, %v478
        %v480 = vpop.f32.mrb[0].mxu0
        %v481 = vadd.f32 %v342, %v480
        %482 = vmatprep.mubr.f32.mxu0 0.0
        %483 = vmatmul.mubr.f32.gmra.mrb[0].mxu0 %v389
        %v484 = vpop.f32.mrb[0].mxu0
        %v485 = vadd.f32 %v347, %v484
        %v486 = vpop.f32.mrb[0].mxu0
        %v487 = vadd.f32 %v347, %v486
        %488 = vmatprep.mubr.f32.mxu0 0.0
        %489 = vmatmul.mubr.f32.gmra.mrb[0].mxu0 %v392
        %v490 = vpop.f32.mrb[0].mxu0
        %v491 = vadd.f32 %v352, %v490
        %v492 = vpop.f32.mrb[0].mxu0
        %v493 = vadd.f32 %v352, %v492
        %494 = vmatprep.mubr.f32.mxu0 0.0
        %495 = vmatmul.mubr.f32.gmra.mrb[0].mxu0 %v395
        %v496 = vpop.f32.mrb[0].mxu0
        %v497 = vadd.f32 %v357, %v496
        %v498 = vpop.f32.mrb[0].mxu0
        %v499 = vadd.f32 %v357, %v498
        %500 = vmatprep.mubr.f32.mxu0 0.0
        %501 = vmatmul.mubr.f32.gmra.mrb[0].mxu0 %v398
        %v502 = vpop.f32.mrb[0].mxu0
        %v503 = vadd.f32 %v362, %v502
        %v504 = vpop.f32.mrb[0].mxu0
        %v505 = vadd.f32 %v362, %v504
        %506 = vmatprep.mubr.f32.mxu0 0.0
        %507 = vmatmul.mubr.f32.gmra.mrb[0].mxu0 %v401
        %v508 = vpop.f32.mrb[0].mxu0
        %v509 = vadd.f32 %v367, %v508
        %v510 = vpop.f32.mrb[0].mxu0
        %v511 = vadd.f32 %v367, %v510
        %512 = vmatprep.mubr.f32.mxu0 0.0
        %513 = vmatmul.mubr.f32.gmra.mrb[0].mxu0 %v404
        %v514 = vpop.f32.mrb[0].mxu0
        %v515 = vadd.f32 %v372, %v514
        %v516 = vpop.f32.mrb[0].mxu0
        %v517 = vadd.f32 %v372, %v516
        %518 = vmatprep.mubr.f32.mxu0 0.0
        %519 = vmatmul.mubr.f32.gmra.mrb[0].mxu0 %v407
        %v520 = vpop.f32.mrb[0].mxu0
        %v521 = vadd.f32 %v377, %v520
        %v522 = vpop.f32.mrb[0].mxu0
        %v523 = vadd.f32 %v377, %v522
        %524 = vmatprep.mubr.f32.mxu0 0.0
        %525 = vmatmul.mubr.f32.gmra.mrb[0].mxu0 %v410
        %v526 = vpop.f32.mrb[0].mxu0
        %v527 = vadd.f32 %v382, %v526
        %v528 = vpop.f32.mrb[0].mxu0
        %v529 = vadd.f32 %v382, %v528
        %530 = vdwg.mxu0
        %531 = vmatprep.subr.mxu0 %v316
        %532 = vmatpush1.msra.mxu0 %v315
        %533 = vmatprep.subr.mxu0 %v320
        %534 = vmatpush1.msra.mxu0 %v319
        %535 = vmatprep.subr.mxu0 0.0
        %536 = vmatpush1.msra.mxu0 0.0
        %537 = vmatprep.subr.mxu0 0.0
        %538 = vmatpush1.msra.mxu0 0.0
        %539 = vmatprep.subr.mxu0 0.0
        %540 = vmatpush1.msra.mxu0 0.0
        %541 = vmatprep.subr.mxu0 0.0
        %542 = vmatpush1.msra.mxu0 0.0
        %543 = vmatprep.subr.mxu0 0.0
        %544 = vmatpush1.msra.mxu0 0.0
        %545 = vmatprep.subr.mxu0 0.0
        %546 = vmatpush1.msra.mxu0 0.0
        %547 = vmatprep.subr.mxu0 0.0
        %548 = vmatpush1.msra.mxu0 0.0
        %549 = vmatprep.subr.mxu0 0.0
        %550 = vmatpush1.msra.mxu0 0.0
        %551 = vmatprep.subr.mxu0 0.0
        %552 = vmatpush1.msra.mxu0 0.0
        %553 = vmatprep.subr.mxu0 0.0
        %554 = vmatpush1.msra.mxu0 0.0
        %555 = vmatprep.subr.mxu0 0.0
        %556 = vmatpush1.msra.mxu0 0.0
        %557 = vmatprep.subr.mxu0 0.0
        %558 = vmatpush1.msra.mxu0 0.0
        %559 = vmatprep.subr.mxu0 0.0
        %560 = vmatpush1.msra.mxu0 0.0
        %561 = vmatprep.subr.mxu0 0.0
        %562 = vmatpush1.msra.mxu0 0.0
        %563 = vmatprep.subr.mxu0 0.0
        %564 = vmatpush1.msra.mxu0 0.0
        %565 = vmatprep.subr.mxu0 0.0
        %566 = vmatpush1.msra.mxu0 0.0
        %567 = vmatprep.subr.mxu0 0.0
        %568 = vmatpush1.msra.mxu0 0.0
        %569 = vmatprep.subr.mxu0 0.0
        %570 = vmatpush1.msra.mxu0 0.0
        %571 = vmatprep.subr.mxu0 0.0
        %572 = vmatpush1.msra.mxu0 0.0
        %573 = vmatprep.subr.mxu0 0.0
        %574 = vmatpush1.msra.mxu0 0.0
        %575 = vmatprep.subr.mxu0 0.0
        %576 = vmatpush1.msra.mxu0 0.0
        %577 = vmatprep.subr.mxu0 0.0
        %578 = vmatpush1.msra.mxu0 0.0
        %579 = vmatprep.subr.mxu0 0.0
        %580 = vmatpush1.msra.mxu0 0.0
        %581 = vmatprep.subr.mxu0 0.0
        %582 = vmatpush1.msra.mxu0 0.0
        %583 = vmatprep.subr.mxu0 0.0
        %584 = vmatpush1.msra.mxu0 0.0
        %585 = vmatprep.subr.mxu0 0.0
        %586 = vmatpush1.msra.mxu0 0.0
        %587 = vmatprep.subr.mxu0 0.0
        %588 = vmatpush1.msra.mxu0 0.0
        %589 = vmatprep.subr.mxu0 0.0
        %590 = vmatpush1.msra.mxu0 0.0
        %591 = vmatprep.subr.mxu0 0.0
        %592 = vmatpush1.msra.mxu0 0.0
        %593 = vmatprep.subr.mxu0 0.0
        %594 = vmatpush1.msra.mxu0 0.0
        %595 = vmatprep.mubr.f32.mxu0 0.0
        %596 = vmatmul.mubr.f32.gmra.mrb[0].mxu0 %v386
        %v597 = vpop.f32.mrb[0].mxu0
        %v598 = vadd.f32 %v342, %v597
        %v599 = vpop.f32.mrb[0].mxu0
        %v600 = vadd.f32 %v342, %v599
        %601 = vmatprep.mubr.f32.mxu0 0.0
        %602 = vmatmul.mubr.f32.gmra.mrb[0].mxu0 %v389
        %v603 = vpop.f32.mrb[0].mxu0
        %v604 = vadd.f32 %v347, %v603
        %v605 = vpop.f32.mrb[0].mxu0
        %v606 = vadd.f32 %v347, %v605
        %607 = vmatprep.mubr.f32.mxu0 0.0
        %608 = vmatmul.mubr.f32.gmra.mrb[0].mxu0 %v392
        %v609 = vpop.f32.mrb[0].mxu0
        %v610 = vadd.f32 %v352, %v609
        %v611 = vpop.f32.mrb[0].mxu0
        %v612 = vadd.f32 %v352, %v611
        %613 = vmatprep.mubr.f32.mxu0 0.0
        %614 = vmatmul.mubr.f32.gmra.mrb[0].mxu0 %v395
        %v615 = vpop.f32.mrb[0].mxu0
        %v616 = vadd.f32 %v357, %v615
        %v617 = vpop.f32.mrb[0].mxu0
        %v618 = vadd.f32 %v357, %v617
        %619 = vmatprep.mubr.f32.mxu0 0.0
        %620 = vmatmul.mubr.f32.gmra.mrb[0].mxu0 %v398
        %v621 = vpop.f32.mrb[0].mxu0
        %v622 = vadd.f32 %v362, %v621
        %v623 = vpop.f32.mrb[0].mxu0
        %v624 = vadd.f32 %v362, %v623
        %625 = vmatprep.mubr.f32.mxu0 0.0
        %626 = vmatmul.mubr.f32.gmra.mrb[0].mxu0 %v401
        %v627 = vpop.f32.mrb[0].mxu0
        %v628 = vadd.f32 %v367, %v627
        %v629 = vpop.f32.mrb[0].mxu0
        %v630 = vadd.f32 %v367, %v629
        %631 = vmatprep.mubr.f32.mxu0 0.0
        %632 = vmatmul.mubr.f32.gmra.mrb[0].mxu0 %v404
        %v633 = vpop.f32.mrb[0].mxu0
        %v634 = vadd.f32 %v372, %v633
        %v635 = vpop.f32.mrb[0].mxu0
        %v636 = vadd.f32 %v372, %v635
        %637 = vmatprep.mubr.f32.mxu0 0.0
        %638 = vmatmul.mubr.f32.gmra.mrb[0].mxu0 %v407
        %v639 = vpop.f32.mrb[0].mxu0
        %v640 = vadd.f32 %v377, %v639
        %v641 = vpop.f32.mrb[0].mxu0
        %v642 = vadd.f32 %v377, %v641
        %643 = vmatprep.mubr.f32.mxu0 0.0
        %644 = vmatmul.mubr.f32.gmra.mrb[0].mxu0 %v410
        %v645 = vpop.f32.mrb[0].mxu0
        %v646 = vadd.f32 %v382, %v645
        %v647 = vpop.f32.mrb[0].mxu0
        %v648 = vadd.f32 %v382, %v647
        %649 = vdwg.mxu0
        %v650 = vmax.f32 %v479, 0.0
        %v651 = vmax.f32 %v481, 0.0
        %v652 = vmax.f32 %v598, 0.0
        %v653 = vmax.f32 %v600, 0.0
        %v654 = vmax.f32 %v485, 0.0
        %v655 = vmax.f32 %v487, 0.0
        %v656 = vmax.f32 %v604, 0.0
        %v657 = vmax.f32 %v606, 0.0
        %v658 = vmax.f32 %v491, 0.0
        %v659 = vmax.f32 %v493, 0.0
        %v660 = vmax.f32 %v610, 0.0
        %v661 = vmax.f32 %v612, 0.0
        %v662 = vmax.f32 %v497, 0.0
        %v663 = vmax.f32 %v499, 0.0
        %v664 = vmax.f32 %v616, 0.0
        %v665 = vmax.f32 %v618, 0.0
        %vm666 = vcmp.lt.f32.partialorder %v650, 0.1
        %vm667 = vcmp.lt.f32.partialorder %v651, 0.1
        %vm668 = vcmp.lt.f32.partialorder %v652, 0.1
        %vm669 = vcmp.lt.f32.partialorder %v653, 0.1
        %vm670 = vcmp.lt.f32.partialorder %v654, 0.1
        %vm671 = vcmp.lt.f32.partialorder %v655, 0.1
        %vm672 = vcmp.lt.f32.partialorder %v656, 0.1
        %vm673 = vcmp.lt.f32.partialorder %v657, 0.1
        %vm674 = vcmp.lt.f32.partialorder %v658, 0.1
        %vm675 = vcmp.lt.f32.partialorder %v659, 0.1
        %vm676 = vcmp.lt.f32.partialorder %v660, 0.1
        %vm677 = vcmp.lt.f32.partialorder %v661, 0.1
        %vm678 = vcmp.lt.f32.partialorder %v662, 0.1
        %vm679 = vcmp.lt.f32.partialorder %v663, 0.1
        %vm680 = vcmp.lt.f32.partialorder %v664, 0.1
        %vm681 = vcmp.lt.f32.partialorder %v665, 0.1
        %v682 = vmul.f32 %v650, %v650
        %v683 = vmul.f32 %v651, %v651
        %v684 = vmul.f32 %v652, %v652
        %v685 = vmul.f32 %v653, %v653
        %v686 = vmul.f32 %v654, %v654
        %v687 = vmul.f32 %v655, %v655
        %v688 = vmul.f32 %v656, %v656
        %v689 = vmul.f32 %v657, %v657
        %v690 = vmul.f32 %v658, %v658
        %v691 = vmul.f32 %v659, %v659
        %v692 = vmul.f32 %v660, %v660
        %v693 = vmul.f32 %v661, %v661
        %v694 = vmul.f32 %v662, %v662
        %v695 = vmul.f32 %v663, %v663
        %v696 = vmul.f32 %v664, %v664
        %v697 = vmul.f32 %v665, %v665
        %v698 = vrcp.pop 0.2
        %v699 = vmul.f32 %v682, %v698
        %v700 = vmul.f32 %v683, %v698
        %v701 = vmul.f32 %v684, %v698
        %v702 = vmul.f32 %v685, %v698
        %v703 = vmul.f32 %v686, %v698
        %v704 = vmul.f32 %v687, %v698
        %v705 = vmul.f32 %v688, %v698
        %v706 = vmul.f32 %v689, %v698
        %v707 = vmul.f32 %v690, %v698
        %v708 = vmul.f32 %v691, %v698
        %v709 = vmul.f32 %v692, %v698
        %v710 = vmul.f32 %v693, %v698
        %v711 = vmul.f32 %v694, %v698
        %v712 = vmul.f32 %v695, %v698
        %v713 = vmul.f32 %v696, %v698
        %v714 = vmul.f32 %v697, %v698
        %v715 = vsub.f32 %v479, 0.05
        %v716 = vsub.f32 %v481, 0.05
        %v717 = vsub.f32 %v598, 0.05
        %v718 = vsub.f32 %v600, 0.05
        %v719 = vsub.f32 %v485, 0.05
        %v720 = vsub.f32 %v487, 0.05
        %v721 = vsub.f32 %v604, 0.05
        %v722 = vsub.f32 %v606, 0.05
        %v723 = vsub.f32 %v491, 0.05
        %v724 = vsub.f32 %v493, 0.05
        %v725 = vsub.f32 %v610, 0.05
        %v726 = vsub.f32 %v612, 0.05
        %v727 = vsub.f32 %v497, 0.05
        %v728 = vsub.f32 %v499, 0.05
        %v729 = vsub.f32 %v616, 0.05
        %v730 = vsub.f32 %v618, 0.05
        %v731 = vsel %vm666, %v699, %v715
        %v732 = vsel %vm667, %v700, %v716
        %v733 = vsel %vm668, %v701, %v717
        %v734 = vsel %vm669, %v702, %v718
        %v735 = vsel %vm670, %v703, %v719
        %v736 = vsel %vm671, %v704, %v720
        %v737 = vsel %vm672, %v705, %v721
        %v738 = vsel %vm673, %v706, %v722
        %v739 = vsel %vm674, %v707, %v723
        %v740 = vsel %vm675, %v708, %v724
        %v741 = vsel %vm676, %v709, %v725
        %v742 = vsel %vm677, %v710, %v726
        %v743 = vsel %vm678, %v711, %v727
        %v744 = vsel %vm679, %v712, %v728
        %v745 = vsel %vm680, %v713, %v729
        %v746 = vsel %vm681, %v714, %v730
        %v747 = vld [vmem:[%s5] sm:$0xff]
        %v748 = vld [vmem:[%s5 + $0x8] sm:$0xff]
        %v749 = vld [vmem:[%s5 + $0x10] sm:$0xff]
        %v750 = vld [vmem:[%s5 + $0x18] sm:$0xff]
        %vm751 = vcmask 261120
        %v753 = vsel %vm751, %v747, 0
        %v756 = vsel %vm751, %v748, 0
        %v759 = vsel %vm751, %v749, 0
        %v762 = vsel %vm751, %v750, 0
        %764 = vmatprep.subr.mxu0 %v732
        %765 = vmatpush1.msra.mxu0 %v731
        %766 = vmatprep.subr.mxu0 %v736
        %767 = vmatpush1.msra.mxu0 %v735
        %768 = vmatprep.subr.mxu0 %v740
        %769 = vmatpush1.msra.mxu0 %v739
        %770 = vmatprep.subr.mxu0 %v744
        %771 = vmatpush1.msra.mxu0 %v743
        %772 = vmatprep.subr.mxu0 0.0
        %773 = vmatpush1.msra.mxu0 0.0
        %774 = vmatprep.subr.mxu0 0.0
        %775 = vmatpush1.msra.mxu0 0.0
        %776 = vmatprep.subr.mxu0 0.0
        %777 = vmatpush1.msra.mxu0 0.0
        %778 = vmatprep.subr.mxu0 0.0
        %779 = vmatpush1.msra.mxu0 0.0
        %780 = vmatprep.subr.mxu0 0.0
        %781 = vmatpush1.msra.mxu0 0.0
        %782 = vmatprep.subr.mxu0 0.0
        %783 = vmatpush1.msra.mxu0 0.0
        %784 = vmatprep.subr.mxu0 0.0
        %785 = vmatpush1.msra.mxu0 0.0
        %786 = vmatprep.subr.mxu0 0.0
        %787 = vmatpush1.msra.mxu0 0.0
        %788 = vmatprep.subr.mxu0 0.0
        %789 = vmatpush1.msra.mxu0 0.0
        %790 = vmatprep.subr.mxu0 0.0
        %791 = vmatpush1.msra.mxu0 0.0
        %792 = vmatprep.subr.mxu0 0.0
        %793 = vmatpush1.msra.mxu0 0.0
        %794 = vmatprep.subr.mxu0 0.0
        %795 = vmatpush1.msra.mxu0 0.0
        %796 = vmatprep.subr.mxu0 0.0
        %797 = vmatpush1.msra.mxu0 0.0
        %798 = vmatprep.subr.mxu0 0.0
        %799 = vmatpush1.msra.mxu0 0.0
        %800 = vmatprep.subr.mxu0 0.0
        %801 = vmatpush1.msra.mxu0 0.0
        %802 = vmatprep.subr.mxu0 0.0
        %803 = vmatpush1.msra.mxu0 0.0
        %804 = vmatprep.subr.mxu0 0.0
        %805 = vmatpush1.msra.mxu0 0.0
        %806 = vmatprep.subr.mxu0 0.0
        %807 = vmatpush1.msra.mxu0 0.0
        %808 = vmatprep.subr.mxu0 0.0
        %809 = vmatpush1.msra.mxu0 0.0
        %810 = vmatprep.subr.mxu0 0.0
        %811 = vmatpush1.msra.mxu0 0.0
        %812 = vmatprep.subr.mxu0 0.0
        %813 = vmatpush1.msra.mxu0 0.0
        %814 = vmatprep.subr.mxu0 0.0
        %815 = vmatpush1.msra.mxu0 0.0
        %816 = vmatprep.subr.mxu0 0.0
        %817 = vmatpush1.msra.mxu0 0.0
        %818 = vmatprep.subr.mxu0 0.0
        %819 = vmatpush1.msra.mxu0 0.0
        %820 = vmatprep.subr.mxu0 0.0
        %821 = vmatpush1.msra.mxu0 0.0
        %822 = vmatprep.subr.mxu0 0.0
        %823 = vmatpush1.msra.mxu0 0.0
        %824 = vmatprep.subr.mxu0 0.0
        %825 = vmatpush1.msra.mxu0 0.0
        %826 = vmatprep.subr.mxu0 0.0
        %827 = vmatpush1.msra.mxu0 0.0
        %828 = vmatprep.mubr.f32.mxu0 0.0
        %829 = vmatmul.mubr.f32.gmra.mrb[0].mxu0 %v753
        %v830 = vpop.f32.mrb[0].mxu0
        %v831 = vadd.f32 0.0, %v830
        %v832 = vpop.f32.mrb[0].mxu0
        %v833 = vadd.f32 0.0, %v832
        %834 = vmatprep.mubr.f32.mxu0 0.0
        %835 = vmatmul.mubr.f32.gmra.mrb[0].mxu0 %v756
        %v836 = vpop.f32.mrb[0].mxu0
        %v837 = vadd.f32 0.0, %v836
        %v838 = vpop.f32.mrb[0].mxu0
        %v839 = vadd.f32 0.0, %v838
        %840 = vmatprep.mubr.f32.mxu0 0.0
        %841 = vmatmul.mubr.f32.gmra.mrb[0].mxu0 %v759
        %v842 = vpop.f32.mrb[0].mxu0
        %v843 = vadd.f32 0.0, %v842
        %v844 = vpop.f32.mrb[0].mxu0
        %v845 = vadd.f32 0.0, %v844
        %846 = vmatprep.mubr.f32.mxu0 0.0
        %847 = vmatmul.mubr.f32.gmra.mrb[0].mxu0 %v762
        %v848 = vpop.f32.mrb[0].mxu0
        %v849 = vadd.f32 0.0, %v848
        %v850 = vpop.f32.mrb[0].mxu0
        %v851 = vadd.f32 0.0, %v850
        %852 = vdwg.mxu0
        %853 = vmatprep.subr.mxu0 %v734
        %854 = vmatpush1.msra.mxu0 %v733
        %855 = vmatprep.subr.mxu0 %v738
        %856 = vmatpush1.msra.mxu0 %v737
        %857 = vmatprep.subr.mxu0 %v742
        %858 = vmatpush1.msra.mxu0 %v741
        %859 = vmatprep.subr.mxu0 %v746
        %860 = vmatpush1.msra.mxu0 %v745
        %861 = vmatprep.subr.mxu0 0.0
        %862 = vmatpush1.msra.mxu0 0.0
        %863 = vmatprep.subr.mxu0 0.0
        %864 = vmatpush1.msra.mxu0 0.0
        %865 = vmatprep.subr.mxu0 0.0
        %866 = vmatpush1.msra.mxu0 0.0
        %867 = vmatprep.subr.mxu0 0.0
        %868 = vmatpush1.msra.mxu0 0.0
        %869 = vmatprep.subr.mxu0 0.0
        %870 = vmatpush1.msra.mxu0 0.0
        %871 = vmatprep.subr.mxu0 0.0
        %872 = vmatpush1.msra.mxu0 0.0
        %873 = vmatprep.subr.mxu0 0.0
        %874 = vmatpush1.msra.mxu0 0.0
        %875 = vmatprep.subr.mxu0 0.0
        %876 = vmatpush1.msra.mxu0 0.0
        %877 = vmatprep.subr.mxu0 0.0
        %878 = vmatpush1.msra.mxu0 0.0
        %879 = vmatprep.subr.mxu0 0.0
        %880 = vmatpush1.msra.mxu0 0.0
        %881 = vmatprep.subr.mxu0 0.0
        %882 = vmatpush1.msra.mxu0 0.0
        %883 = vmatprep.subr.mxu0 0.0
        %884 = vmatpush1.msra.mxu0 0.0
        %885 = vmatprep.subr.mxu0 0.0
        %886 = vmatpush1.msra.mxu0 0.0
        %887 = vmatprep.subr.mxu0 0.0
        %888 = vmatpush1.msra.mxu0 0.0
        %889 = vmatprep.subr.mxu0 0.0
        %890 = vmatpush1.msra.mxu0 0.0
        %891 = vmatprep.subr.mxu0 0.0
        %892 = vmatpush1.msra.mxu0 0.0
        %893 = vmatprep.subr.mxu0 0.0
        %894 = vmatpush1.msra.mxu0 0.0
        %895 = vmatprep.subr.mxu0 0.0
        %896 = vmatpush1.msra.mxu0 0.0
        %897 = vmatprep.subr.mxu0 0.0
        %898 = vmatpush1.msra.mxu0 0.0
        %899 = vmatprep.subr.mxu0 0.0
        %900 = vmatpush1.msra.mxu0 0.0
        %901 = vmatprep.subr.mxu0 0.0
        %902 = vmatpush1.msra.mxu0 0.0
        %903 = vmatprep.subr.mxu0 0.0
        %904 = vmatpush1.msra.mxu0 0.0
        %905 = vmatprep.subr.mxu0 0.0
        %906 = vmatpush1.msra.mxu0 0.0
        %907 = vmatprep.subr.mxu0 0.0
        %908 = vmatpush1.msra.mxu0 0.0
        %909 = vmatprep.subr.mxu0 0.0
        %910 = vmatpush1.msra.mxu0 0.0
        %911 = vmatprep.subr.mxu0 0.0
        %912 = vmatpush1.msra.mxu0 0.0
        %913 = vmatprep.subr.mxu0 0.0
        %914 = vmatpush1.msra.mxu0 0.0
        %915 = vmatprep.subr.mxu0 0.0
        %916 = vmatpush1.msra.mxu0 0.0
        %917 = vmatprep.mubr.f32.mxu0 0.0
        %918 = vmatmul.mubr.f32.gmra.mrb[0].mxu0 %v753
        %v919 = vpop.f32.mrb[0].mxu0
        %v920 = vadd.f32 0.0, %v919
        %v921 = vpop.f32.mrb[0].mxu0
        %v922 = vadd.f32 0.0, %v921
        %923 = vmatprep.mubr.f32.mxu0 0.0
        %924 = vmatmul.mubr.f32.gmra.mrb[0].mxu0 %v756
        %v925 = vpop.f32.mrb[0].mxu0
        %v926 = vadd.f32 0.0, %v925
        %v927 = vpop.f32.mrb[0].mxu0
        %v928 = vadd.f32 0.0, %v927
        %929 = vmatprep.mubr.f32.mxu0 0.0
        %930 = vmatmul.mubr.f32.gmra.mrb[0].mxu0 %v759
        %v931 = vpop.f32.mrb[0].mxu0
        %v932 = vadd.f32 0.0, %v931
        %v933 = vpop.f32.mrb[0].mxu0
        %v934 = vadd.f32 0.0, %v933
        %935 = vmatprep.mubr.f32.mxu0 0.0
        %936 = vmatmul.mubr.f32.gmra.mrb[0].mxu0 %v762
        %v937 = vpop.f32.mrb[0].mxu0
        %v938 = vadd.f32 0.0, %v937
        %v939 = vpop.f32.mrb[0].mxu0
        %v940 = vadd.f32 0.0, %v939
        %941 = vdwg.mxu0
        %v942 = vadd.f32 %v503, %v831
        %v943 = vadd.f32 %v505, %v833
        %v944 = vadd.f32 %v622, %v920
        %v945 = vadd.f32 %v624, %v922
        %v946 = vadd.f32 %v509, %v837
        %v947 = vadd.f32 %v511, %v839
        %v948 = vadd.f32 %v628, %v926
        %v949 = vadd.f32 %v630, %v928
        %v950 = vadd.f32 %v515, %v843
        %v951 = vadd.f32 %v517, %v845
        %v952 = vadd.f32 %v634, %v932
        %v953 = vadd.f32 %v636, %v934
        %v954 = vadd.f32 %v521, %v849
        %v955 = vadd.f32 %v523, %v851
        %v956 = vadd.f32 %v640, %v938
        %v957 = vadd.f32 %v642, %v940
        %v958 = vmax.f32 %v942, 0.0
        %v959 = vmax.f32 %v943, 0.0
        %v960 = vmax.f32 %v944, 0.0
        %v961 = vmax.f32 %v945, 0.0
        %v962 = vmax.f32 %v946, 0.0
        %v963 = vmax.f32 %v947, 0.0
        %v964 = vmax.f32 %v948, 0.0
        %v965 = vmax.f32 %v949, 0.0
        %v966 = vmax.f32 %v950, 0.0
        %v967 = vmax.f32 %v951, 0.0
        %v968 = vmax.f32 %v952, 0.0
        %v969 = vmax.f32 %v953, 0.0
        %v970 = vmax.f32 %v954, 0.0
        %v971 = vmax.f32 %v955, 0.0
        %v972 = vmax.f32 %v956, 0.0
        %v973 = vmax.f32 %v957, 0.0
        %vm974 = vcmp.lt.f32.partialorder %v958, 0.1
        %vm975 = vcmp.lt.f32.partialorder %v959, 0.1
        %vm976 = vcmp.lt.f32.partialorder %v960, 0.1
        %vm977 = vcmp.lt.f32.partialorder %v961, 0.1
        %vm978 = vcmp.lt.f32.partialorder %v962, 0.1
        %vm979 = vcmp.lt.f32.partialorder %v963, 0.1
        %vm980 = vcmp.lt.f32.partialorder %v964, 0.1
        %vm981 = vcmp.lt.f32.partialorder %v965, 0.1
        %vm982 = vcmp.lt.f32.partialorder %v966, 0.1
        %vm983 = vcmp.lt.f32.partialorder %v967, 0.1
        %vm984 = vcmp.lt.f32.partialorder %v968, 0.1
        %vm985 = vcmp.lt.f32.partialorder %v969, 0.1
        %vm986 = vcmp.lt.f32.partialorder %v970, 0.1
        %vm987 = vcmp.lt.f32.partialorder %v971, 0.1
        %vm988 = vcmp.lt.f32.partialorder %v972, 0.1
        %vm989 = vcmp.lt.f32.partialorder %v973, 0.1
        %v990 = vmul.f32 %v958, %v958
        %v991 = vmul.f32 %v959, %v959
        %v992 = vmul.f32 %v960, %v960
        %v993 = vmul.f32 %v961, %v961
        %v994 = vmul.f32 %v962, %v962
        %v995 = vmul.f32 %v963, %v963
        %v996 = vmul.f32 %v964, %v964
        %v997 = vmul.f32 %v965, %v965
        %v998 = vmul.f32 %v966, %v966
        %v999 = vmul.f32 %v967, %v967
        %v1000 = vmul.f32 %v968, %v968
        %v1001 = vmul.f32 %v969, %v969
        %v1002 = vmul.f32 %v970, %v970
        %v1003 = vmul.f32 %v971, %v971
        %v1004 = vmul.f32 %v972, %v972
        %v1005 = vmul.f32 %v973, %v973
        %v1006 = vmul.f32 %v990, %v698
        %v1007 = vmul.f32 %v991, %v698
        %v1008 = vmul.f32 %v992, %v698
        %v1009 = vmul.f32 %v993, %v698
        %v1010 = vmul.f32 %v994, %v698
        %v1011 = vmul.f32 %v995, %v698
        %v1012 = vmul.f32 %v996, %v698
        %v1013 = vmul.f32 %v997, %v698
        %v1014 = vmul.f32 %v998, %v698
        %v1015 = vmul.f32 %v999, %v698
        %v1016 = vmul.f32 %v1000, %v698
        %v1017 = vmul.f32 %v1001, %v698
        %v1018 = vmul.f32 %v1002, %v698
        %v1019 = vmul.f32 %v1003, %v698
        %v1020 = vmul.f32 %v1004, %v698
        %v1021 = vmul.f32 %v1005, %v698
        %v1022 = vsub.f32 %v942, 0.05
        %v1023 = vsub.f32 %v943, 0.05
        %v1024 = vsub.f32 %v944, 0.05
        %v1025 = vsub.f32 %v945, 0.05
        %v1026 = vsub.f32 %v946, 0.05
        %v1027 = vsub.f32 %v947, 0.05
        %v1028 = vsub.f32 %v948, 0.05
        %v1029 = vsub.f32 %v949, 0.05
        %v1030 = vsub.f32 %v950, 0.05
        %v1031 = vsub.f32 %v951, 0.05
        %v1032 = vsub.f32 %v952, 0.05
        %v1033 = vsub.f32 %v953, 0.05
        %v1034 = vsub.f32 %v954, 0.05
        %v1035 = vsub.f32 %v955, 0.05
        %v1036 = vsub.f32 %v956, 0.05
        %v1037 = vsub.f32 %v957, 0.05
        %v1038 = vsel %vm974, %v1006, %v1022
        %v1039 = vsel %vm975, %v1007, %v1023
        %v1040 = vsel %vm976, %v1008, %v1024
        %v1041 = vsel %vm977, %v1009, %v1025
        %v1042 = vsel %vm978, %v1010, %v1026
        %v1043 = vsel %vm979, %v1011, %v1027
        %v1044 = vsel %vm980, %v1012, %v1028
        %v1045 = vsel %vm981, %v1013, %v1029
        %v1046 = vsel %vm982, %v1014, %v1030
        %v1047 = vsel %vm983, %v1015, %v1031
        %v1048 = vsel %vm984, %v1016, %v1032
        %v1049 = vsel %vm985, %v1017, %v1033
        %v1050 = vsel %vm986, %v1018, %v1034
        %v1051 = vsel %vm987, %v1019, %v1035
        %v1052 = vsel %vm988, %v1020, %v1036
        %v1053 = vsel %vm989, %v1021, %v1037
        %v1054 = vld [vmem:[%s6] sm:$0xff]
        %v1056 = vsel %vm751, %v1054, 0
        %1058 = vmatprep.subr.mxu0 %v1039
        %1059 = vmatpush1.msra.mxu0 %v1038
        %1060 = vmatprep.subr.mxu0 %v1043
        %1061 = vmatpush1.msra.mxu0 %v1042
        %1062 = vmatprep.subr.mxu0 %v1047
        %1063 = vmatpush1.msra.mxu0 %v1046
        %1064 = vmatprep.subr.mxu0 %v1051
        %1065 = vmatpush1.msra.mxu0 %v1050
        %1066 = vmatprep.subr.mxu0 0.0
        %1067 = vmatpush1.msra.mxu0 0.0
        %1068 = vmatprep.subr.mxu0 0.0
        %1069 = vmatpush1.msra.mxu0 0.0
        %1070 = vmatprep.subr.mxu0 0.0
        %1071 = vmatpush1.msra.mxu0 0.0
        %1072 = vmatprep.subr.mxu0 0.0
        %1073 = vmatpush1.msra.mxu0 0.0
        %1074 = vmatprep.subr.mxu0 0.0
        %1075 = vmatpush1.msra.mxu0 0.0
        %1076 = vmatprep.subr.mxu0 0.0
        %1077 = vmatpush1.msra.mxu0 0.0
        %1078 = vmatprep.subr.mxu0 0.0
        %1079 = vmatpush1.msra.mxu0 0.0
        %1080 = vmatprep.subr.mxu0 0.0
        %1081 = vmatpush1.msra.mxu0 0.0
        %1082 = vmatprep.subr.mxu0 0.0
        %1083 = vmatpush1.msra.mxu0 0.0
        %1084 = vmatprep.subr.mxu0 0.0
        %1085 = vmatpush1.msra.mxu0 0.0
        %1086 = vmatprep.subr.mxu0 0.0
        %1087 = vmatpush1.msra.mxu0 0.0
        %1088 = vmatprep.subr.mxu0 0.0
        %1089 = vmatpush1.msra.mxu0 0.0
        %1090 = vmatprep.subr.mxu0 0.0
        %1091 = vmatpush1.msra.mxu0 0.0
        %1092 = vmatprep.subr.mxu0 0.0
        %1093 = vmatpush1.msra.mxu0 0.0
        %1094 = vmatprep.subr.mxu0 0.0
        %1095 = vmatpush1.msra.mxu0 0.0
        %1096 = vmatprep.subr.mxu0 0.0
        %1097 = vmatpush1.msra.mxu0 0.0
        %1098 = vmatprep.subr.mxu0 0.0
        %1099 = vmatpush1.msra.mxu0 0.0
        %1100 = vmatprep.subr.mxu0 0.0
        %1101 = vmatpush1.msra.mxu0 0.0
        %1102 = vmatprep.subr.mxu0 0.0
        %1103 = vmatpush1.msra.mxu0 0.0
        %1104 = vmatprep.subr.mxu0 0.0
        %1105 = vmatpush1.msra.mxu0 0.0
        %1106 = vmatprep.subr.mxu0 0.0
        %1107 = vmatpush1.msra.mxu0 0.0
        %1108 = vmatprep.subr.mxu0 0.0
        %1109 = vmatpush1.msra.mxu0 0.0
        %1110 = vmatprep.subr.mxu0 0.0
        %1111 = vmatpush1.msra.mxu0 0.0
        %1112 = vmatprep.subr.mxu0 0.0
        %1113 = vmatpush1.msra.mxu0 0.0
        %1114 = vmatprep.subr.mxu0 0.0
        %1115 = vmatpush1.msra.mxu0 0.0
        %1116 = vmatprep.subr.mxu0 0.0
        %1117 = vmatpush1.msra.mxu0 0.0
        %1118 = vmatprep.subr.mxu0 0.0
        %1119 = vmatpush1.msra.mxu0 0.0
        %1120 = vmatprep.subr.mxu0 0.0
        %1121 = vmatpush1.msra.mxu0 0.0
        %1122 = vmatprep.mubr.f32.mxu0 0.0
        %1123 = vmatmul.mubr.f32.gmra.mrb[0].mxu0 %v1056
        %v1124 = vpop.f32.mrb[0].mxu0
        %v1125 = vadd.f32 0.0, %v1124
        %v1126 = vpop.f32.mrb[0].mxu0
        %v1127 = vadd.f32 0.0, %v1126
        %1128 = vdwg.mxu0
        %1129 = vmatprep.subr.mxu0 %v1041
        %1130 = vmatpush1.msra.mxu0 %v1040
        %1131 = vmatprep.subr.mxu0 %v1045
        %1132 = vmatpush1.msra.mxu0 %v1044
        %1133 = vmatprep.subr.mxu0 %v1049
        %1134 = vmatpush1.msra.mxu0 %v1048
        %1135 = vmatprep.subr.mxu0 %v1053
        %1136 = vmatpush1.msra.mxu0 %v1052
        %1137 = vmatprep.subr.mxu0 0.0
        %1138 = vmatpush1.msra.mxu0 0.0
        %1139 = vmatprep.subr.mxu0 0.0
        %1140 = vmatpush1.msra.mxu0 0.0
        %1141 = vmatprep.subr.mxu0 0.0
        %1142 = vmatpush1.msra.mxu0 0.0
        %1143 = vmatprep.subr.mxu0 0.0
        %1144 = vmatpush1.msra.mxu0 0.0
        %1145 = vmatprep.subr.mxu0 0.0
        %1146 = vmatpush1.msra.mxu0 0.0
        %1147 = vmatprep.subr.mxu0 0.0
        %1148 = vmatpush1.msra.mxu0 0.0
        %1149 = vmatprep.subr.mxu0 0.0
        %1150 = vmatpush1.msra.mxu0 0.0
        %1151 = vmatprep.subr.mxu0 0.0
        %1152 = vmatpush1.msra.mxu0 0.0
        %1153 = vmatprep.subr.mxu0 0.0
        %1154 = vmatpush1.msra.mxu0 0.0
        %1155 = vmatprep.subr.mxu0 0.0
        %1156 = vmatpush1.msra.mxu0 0.0
        %1157 = vmatprep.subr.mxu0 0.0
        %1158 = vmatpush1.msra.mxu0 0.0
        %1159 = vmatprep.subr.mxu0 0.0
        %1160 = vmatpush1.msra.mxu0 0.0
        %1161 = vmatprep.subr.mxu0 0.0
        %1162 = vmatpush1.msra.mxu0 0.0
        %1163 = vmatprep.subr.mxu0 0.0
        %1164 = vmatpush1.msra.mxu0 0.0
        %1165 = vmatprep.subr.mxu0 0.0
        %1166 = vmatpush1.msra.mxu0 0.0
        %1167 = vmatprep.subr.mxu0 0.0
        %1168 = vmatpush1.msra.mxu0 0.0
        %1169 = vmatprep.subr.mxu0 0.0
        %1170 = vmatpush1.msra.mxu0 0.0
        %1171 = vmatprep.subr.mxu0 0.0
        %1172 = vmatpush1.msra.mxu0 0.0
        %1173 = vmatprep.subr.mxu0 0.0
        %1174 = vmatpush1.msra.mxu0 0.0
        %1175 = vmatprep.subr.mxu0 0.0
        %1176 = vmatpush1.msra.mxu0 0.0
        %1177 = vmatprep.subr.mxu0 0.0
        %1178 = vmatpush1.msra.mxu0 0.0
        %1179 = vmatprep.subr.mxu0 0.0
        %1180 = vmatpush1.msra.mxu0 0.0
        %1181 = vmatprep.subr.mxu0 0.0
        %1182 = vmatpush1.msra.mxu0 0.0
        %1183 = vmatprep.subr.mxu0 0.0
        %1184 = vmatpush1.msra.mxu0 0.0
        %1185 = vmatprep.subr.mxu0 0.0
        %1186 = vmatpush1.msra.mxu0 0.0
        %1187 = vmatprep.subr.mxu0 0.0
        %1188 = vmatpush1.msra.mxu0 0.0
        %1189 = vmatprep.subr.mxu0 0.0
        %1190 = vmatpush1.msra.mxu0 0.0
        %1191 = vmatprep.subr.mxu0 0.0
        %1192 = vmatpush1.msra.mxu0 0.0
        %1193 = vmatprep.mubr.f32.mxu0 0.0
        %1194 = vmatmul.mubr.f32.gmra.mrb[0].mxu0 %v1056
        %v1195 = vpop.f32.mrb[0].mxu0
        %v1196 = vadd.f32 0.0, %v1195
        %v1197 = vpop.f32.mrb[0].mxu0
        %v1198 = vadd.f32 0.0, %v1197
        %1199 = vdwg.mxu0
        %v1200 = vadd.f32 %v527, %v1125
        %v1201 = vadd.f32 %v529, %v1127
        %v1202 = vadd.f32 %v646, %v1196
        %v1203 = vadd.f32 %v648, %v1198
        %v1204 = vmax.f32 %v1200, 0.0
        %v1205 = vmax.f32 %v1201, 0.0
        %v1206 = vmax.f32 %v1202, 0.0
        %v1207 = vmax.f32 %v1203, 0.0
        %vm1208 = vcmp.lt.f32.partialorder %v1204, 0.1
        %vm1209 = vcmp.lt.f32.partialorder %v1205, 0.1
        %vm1210 = vcmp.lt.f32.partialorder %v1206, 0.1
        %vm1211 = vcmp.lt.f32.partialorder %v1207, 0.1
        %v1212 = vmul.f32 %v1204, %v1204
        %v1213 = vmul.f32 %v1205, %v1205
        %v1214 = vmul.f32 %v1206, %v1206
        %v1215 = vmul.f32 %v1207, %v1207
        %v1216 = vmul.f32 %v1212, %v698
        %v1217 = vmul.f32 %v1213, %v698
        %v1218 = vmul.f32 %v1214, %v698
        %v1219 = vmul.f32 %v1215, %v698
        %v1220 = vsub.f32 %v1200, 0.05
        %v1221 = vsub.f32 %v1201, 0.05
        %v1222 = vsub.f32 %v1202, 0.05
        %v1223 = vsub.f32 %v1203, 0.05
        %v1224 = vsel %vm1208, %v1216, %v1220
        %v1225 = vsel %vm1209, %v1217, %v1221
        %v1226 = vsel %vm1210, %v1218, %v1222
        %v1227 = vsel %vm1211, %v1219, %v1223
        %v1228 = vld [vmem:[%s1] sm:$0xff]
        %v1229 = vld [vmem:[%s1 + $0x8] sm:$0xff]
        %1231 = vset.pattern.permute.xlu0 0
        %1232 = vperm.xlu0 %1231, %v1228
        %v1233 = vpop.permute.xlu0 %1232
        %1236 = vset.pattern.permute.xlu0 0
        %1237 = vperm.xlu0 %1236, %v1229
        %v1238 = vpop.permute.xlu0 %1237
        %v1240 = vsub.f32 %v313, %v1233
        %v1241 = vsub.f32 %v314, %v1233
        %v1242 = vsub.f32 %v315, %v1233
        %v1243 = vsub.f32 %v316, %v1233
        %v1244 = vsub.f32 %v317, %v1238
        %v1245 = vsub.f32 %v318, %v1238
        %v1246 = vsub.f32 %v319, %v1238
        %v1247 = vsub.f32 %v320, %v1238
        %v1248 = vmul.f32 %v1240, %v1240
        %v1249 = vmul.f32 %v1241, %v1241
        %v1250 = vmul.f32 %v1242, %v1242
        %v1251 = vmul.f32 %v1243, %v1243
        %v1252 = vmul.f32 %v1244, %v1244
        %v1253 = vmul.f32 %v1245, %v1245
        %v1254 = vmul.f32 %v1246, %v1246
        %v1255 = vmul.f32 %v1247, %v1247
        %v1256 = vadd.f32 %v1248, %v1252
        %v1257 = vrot.slane %v1256, 4
        %v1258 = vadd.f32 %v1256, %v1257
        %v1259 = vrot.slane %v1258, 2
        %v1260 = vadd.f32 %v1258, %v1259
        %v1261 = vrot.slane %v1260, 1
        %v1262 = vadd.f32 %v1260, %v1261
        %v1263 = vadd.f32 %v1249, %v1253
        %v1264 = vrot.slane %v1263, 4
        %v1265 = vadd.f32 %v1263, %v1264
        %v1266 = vrot.slane %v1265, 2
        %v1267 = vadd.f32 %v1265, %v1266
        %v1268 = vrot.slane %v1267, 1
        %v1269 = vadd.f32 %v1267, %v1268
        %v1270 = vadd.f32 %v1250, %v1254
        %v1271 = vrot.slane %v1270, 4
        %v1272 = vadd.f32 %v1270, %v1271
        %v1273 = vrot.slane %v1272, 2
        %v1274 = vadd.f32 %v1272, %v1273
        %v1275 = vrot.slane %v1274, 1
        %v1276 = vadd.f32 %v1274, %v1275
        %v1277 = vadd.f32 %v1251, %v1255
        %v1278 = vrot.slane %v1277, 4
        %v1279 = vadd.f32 %v1277, %v1278
        %v1280 = vrot.slane %v1279, 2
        %v1281 = vadd.f32 %v1279, %v1280
        %v1282 = vrot.slane %v1281, 1
        %v1283 = vadd.f32 %v1281, %v1282
        %v1284 = vmul.f32 %v1262, 0.001
        %v1285 = vmul.f32 %v1269, 0.001
        %v1286 = vmul.f32 %v1276, 0.001
        %v1287 = vmul.f32 %v1283, 0.001
        %v1288 = vld [vmem:[%s2] sm:$0xff]
        %1290 = vset.pattern.permute.xlu0 0
        %1291 = vperm.xlu0 %1290, %v1288
        %v1292 = vpop.permute.xlu0 %1291
        %v1294 = vsub.f32 %v1224, %v1292
        %v1295 = vsub.f32 %v1225, %v1292
        %v1296 = vsub.f32 %v1226, %v1292
        %v1297 = vsub.f32 %v1227, %v1292
        %v1298 = vmax.f32 %v1294, 0.0
        %v1299 = vmax.f32 %v1295, 0.0
        %v1300 = vmax.f32 %v1296, 0.0
        %v1301 = vmax.f32 %v1297, 0.0
        %vm1302 = vcmp.lt.f32.partialorder %v1298, 0.1
        %vm1303 = vcmp.lt.f32.partialorder %v1299, 0.1
        %vm1304 = vcmp.lt.f32.partialorder %v1300, 0.1
        %vm1305 = vcmp.lt.f32.partialorder %v1301, 0.1
        %v1306 = vmul.f32 %v1298, %v1298
        %v1307 = vmul.f32 %v1299, %v1299
        %v1308 = vmul.f32 %v1300, %v1300
        %v1309 = vmul.f32 %v1301, %v1301
        %v1310 = vmul.f32 %v1306, %v698
        %v1311 = vmul.f32 %v1307, %v698
        %v1312 = vmul.f32 %v1308, %v698
        %v1313 = vmul.f32 %v1309, %v698
        %v1314 = vsub.f32 %v1294, 0.05
        %v1315 = vsub.f32 %v1295, 0.05
        %v1316 = vsub.f32 %v1296, 0.05
        %v1317 = vsub.f32 %v1297, 0.05
        %v1318 = vsel %vm1302, %v1310, %v1314
        %v1319 = vsel %vm1303, %v1311, %v1315
        %v1320 = vsel %vm1304, %v1312, %v1316
        %v1321 = vsel %vm1305, %v1313, %v1317
        %v1322 = vadd.f32 %v1318, %v1284
        %v1323 = vadd.f32 %v1319, %v1285
        %v1324 = vadd.f32 %v1320, %v1286
        %v1325 = vadd.f32 %v1321, %v1287
        %1326 = vst [vmem:[%s310] sm:$0xff] %v1322
        %1327 = vst [vmem:[%s310 + $0x8] sm:$0xff] %v1323
        %1328 = vst [vmem:[%s310 + $0x10] sm:$0xff] %v1324
        %1329 = vst [vmem:[%s310 + $0x18] sm:$0xff] %v1325
        %s1330 = sand.u32 %s181, 1
        %s1331 = scalar_lea.sflag [#allocation4], %s1330
        %s1332 = sand.u32 %s181, 1
        %s1333 = smul.addr %s1332, 32
        %s1334 = scalar_lea.vmem [#allocation3], %s1333
        // Predicated region
        $region72: #{icnn_forward.1} parent=66 // pred_check
          %p1335 = pneg %p191
        $region73: #{icnn_forward.1} parent=66 // pred_check_branch
          %1337 = sbr.rel (%p1335) target = $region75
        $region74: #{icnn_forward.1} parent=66 // pred_region
          %s1338 = smul.u32 4, %s21
          %s1340 = ssub.s32 512, 512
          %1341 = vsyncadd %s1331, %s1340
          %s1342 = smul.addr %s1338, 128
          %s1343 = scalar_lea.hbm %s7, %s1342
          %s1345 = sshll.u32 %s1334, 4
          %s1346 = int_to_ptr.vmem [resolvable:$true] %s1345
          %1348 = dma.vmem_to_hbm [thread:$0]  %s1346, 512, %s1343, %s1331
        $region75: #{icnn_forward.1} parent=66 // pred_fallthru
          _
      $region67: #{icnn_forward.1} parent=5 // pred_fallthru
        _
      %p1349 = scmp.le.s32.totalorder 2, %s16
      // Predicated region
      $region76: #{icnn_forward.1} parent=5 // pred_check
        %p1350 = pneg %p1349
      $region77: #{icnn_forward.1} parent=5 // pred_check_branch
        %1352 = sbr.rel (%p1350) target = $region79
      $region78: #{icnn_forward.1} parent=5 // pred_region
        %s1353 = ssub.s32 %s16, 2
        // Predicated region
        $region80: #{icnn_forward.1} parent=78 // pred_check
          %p1354 = pneg %p197
        $region81: #{icnn_forward.1} parent=78 // pred_check_branch
          %1356 = sbr.rel (%p1354) target = $region83
        $region82: #{icnn_forward.1} parent=78 // pred_region
          %s1357 = sand.u32 %s182, 1
          %s1358 = scalar_lea.sflag [#allocation4], %s1357
          %s1359 = sand.u32 %s182, 1
          %s1360 = smul.addr %s1359, 32
          %s1361 = scalar_lea.vmem [#allocation3], %s1360
          %1362 = dma.done %s1358, 512
        $region83: #{icnn_forward.1} parent=78 // pred_fallthru
          _
      $region79: #{icnn_forward.1} parent=5 // pred_fallthru
        _
    $region6: #{icnn_forward.1} parent=1 // loop_footer
      %s20 = sadd.s32 1, %s16
    $region7: #{icnn_forward.1} parent=1 // loop_footer_branch
      %15 = sbr.rel target = $region3
    $region8: #{icnn_forward.1} parent=1 // loop_exit
      _
    %1363 = vsyncpa [#allocation4], 1
    %s1364 = scalar_lea.sflag [#allocation4], 1
    %1365 = vsyncpa %s1364, 1

</llo_original>
